<compile_context>
chip_gen: v7x
topology: tpu7x:2x2x1
jax: 0.10.0
libtpu: 0.0.40
codegen_flags: <defaults>
</compile_context>

<pallas_src>
import jax
import jax.numpy as jnp
from jax.experimental import pallas as pl
from jax.experimental.pallas import tpu as pltpu


# --------------------------- generation-aware sizing ------------------------
def _vmem_capacity_bytes():
    try:
        info = pltpu.get_tpu_info()
        cap = getattr(info, "vmem_capacity_bytes", None)
        if cap:
            return int(cap)
    except Exception:
        pass
    return 64 * 1024 * 1024  # conservative fallback (v7x per-TC VMEM)


_VMEM_CAP = _vmem_capacity_bytes()
# v7x (64 MiB): limit 48 MiB; v5e/v6e (128 MiB): limit 96 MiB.
_VMEM_LIMIT = int(min(_VMEM_CAP * 3 // 4, 96 * 1024 * 1024))
# Target live working set (double-buffered inputs + in-body f32 temporaries).
_BLOCK_BUDGET = _VMEM_LIMIT // 2
# Rough count of live full-size f32 slabs per step:
#   2 (double-buffered input) + ~6 (x, x_h, x_w, d_h, d_w, products).
_LIVE_FACTOR = 8


def _pick_bt(B, bytes_per_batch, budget):
    """Largest divisor of B that fits the budget; capped at B//2 so the
    'parallel' batch grid has >= 2 steps (v7x megacore) when B >= 2."""
    cap = B // 2 if B >= 2 else 1
    for bt in range(cap, 0, -1):
        if B % bt == 0 and bt * bytes_per_batch <= budget:
            return bt
    return 1


# --------------------------------- kernel -----------------------------------
def _make_edge_smoothness_kernel(C, w, hw):
    inv_c = 1.0 / float(C)

    def kernel(x_ref, mask_ref, out_ref):
        # x: (C+Cp, Bt, hw) — image channels first, then disparity channels.
        x = x_ref[...].astype(jnp.float32)

        # One circular roll per gradient direction on the combined slab (XLU).
        # Left-shift by w == next row (H gradient); by 1 == next column (W).
        x_h = pltpu.roll(x, hw - w, 2)
        x_w = pltpu.roll(x, hw - 1, 2)

        d_h = jnp.abs(x - x_h)
        d_w = jnp.abs(x - x_w)

        # Edge-aware weights: exp(-mean over IMAGE channels). The channel axis
        # is the LEADING axis, so this is plain VPU adds (no cross-sublane XLU).
        wgt_h = jnp.exp(-jnp.sum(d_h[:C], axis=0) * inv_c)      # (Bt, hw)
        wgt_w = jnp.exp(-jnp.sum(d_w[:C], axis=0) * inv_c)

        # Boundary masks for the wrapped circular-roll positions, applied to
        # the Cp-independent weight (saves Cp-1 full-size multiplies).
        wm_h = wgt_h * mask_ref[0:1, :]                         # (Bt, hw)
        wm_w = wgt_w * mask_ref[1:2, :]

        # Disparity smoothness summed over disparity channels (leading axis,
        # VPU), weighted, then reduced over the batch sublanes only. The
        # cross-lane reduction + mean division happen in the XLA wrapper.
        sm_h = jnp.sum(d_h[C:], axis=0) * wm_h                  # (Bt, hw)
        sm_w = jnp.sum(d_w[C:], axis=0) * wm_w

        out_ref[0:1, :] = jnp.sum(sm_h, axis=0, keepdims=True)  # (1, hw)
        out_ref[1:2, :] = jnp.sum(sm_w, axis=0, keepdims=True)

    return kernel


# --------------------------------- wrapper ----------------------------------
def _edge_smoothness_pallas(scaled_img_t, disp):
    """mean(|grad_h(disp)|*exp(-mean_C|grad_h(img)|)) + same along W.

    scaled_img_t: (C, B, h, w) channel-outer pooled image.
    disp:         (B, Cp, h, w) disparity at the same resolution.
    """
    C, B, h, w = scaled_img_t.shape
    Bp, Cp, hp, wp = disp.shape
    assert (B, h, w) == (Bp, hp, wp)
    hw = h * w
    Ct = C + Cp

    bytes_per_batch = _LIVE_FACTOR * Ct * hw * 4
    Bt = _pick_bt(B, bytes_per_batch, _BLOCK_BUDGET)
    nb = B // Bt

    # Repack to (nb, channel, Bt, hw): channel-outer, sublane(batch)-dense,
    # lane(hw)-dense blocks; concat so the kernel rolls one slab per direction.
    img_blk = scaled_img_t.reshape(C, nb, Bt, hw).transpose(1, 0, 2, 3)
    pred_blk = disp.reshape(nb, Bt, Cp, hw).transpose(0, 2, 1, 3)
    x = jnp.concatenate([img_blk.astype(jnp.float32),
                         pred_blk.astype(jnp.float32)], axis=1)   # (nb, Ct, Bt, hw)

    # Boundary masks for the wrapped (circular-roll) positions, built once.
    idx = jnp.arange(hw, dtype=jnp.int32)
    mask_h = (idx < (h - 1) * w).astype(jnp.float32)      # valid H-gradient rows
    mask_w = ((idx % w) < (w - 1)).astype(jnp.float32)    # valid W-gradient cols
    masks = jnp.stack([mask_h, mask_w])                   # (2, hw)

    kernel = _make_edge_smoothness_kernel(C, w, hw)
    part = pl.pallas_call(
        kernel,
        out_shape=jax.ShapeDtypeStruct((nb, 2, hw), jnp.float32),
        grid=(nb,),
        in_specs=[
            pl.BlockSpec((None, Ct, Bt, hw), lambda b: (b, 0, 0, 0)),
            pl.BlockSpec((2, hw), lambda b: (0, 0)),
        ],
        out_specs=pl.BlockSpec((None, 2, hw), lambda b: (b, 0, 0)),
        compiler_params=pltpu.CompilerParams(
            dimension_semantics=("parallel",),
            vmem_limit_bytes=_VMEM_LIMIT),
    )(x, masks)

    # Final cross-lane reduction + mean division in XLA (tiny).
    sum_h = jnp.sum(part[:, 0, :])
    sum_w = jnp.sum(part[:, 1, :])
    mean_h = sum_h / jnp.float32(B * Cp * (h - 1) * w)
    mean_w = sum_w / jnp.float32(B * Cp * h * (w - 1))
    return mean_h + mean_w


@jax.jit
def smoothness_loss(img, pred_disp):
    B, C, H, W = img.shape
    # One channel-outer transpose of the image, shared by every scale.
    img_t = jnp.transpose(img, (1, 0, 2, 3))          # (C, B, H, W)
    loss = jnp.float32(0.0)
    for disp in pred_disp:
        _, _, h, w = disp.shape
        # adaptive_avg_pool2d with integer bin sizes, done in XLA so the kernel
        # only reads the pooled (kh*kw-times-smaller) operand.
        # TODO(synk): general adaptive_avg_pool2d with non-integer bins is not implemented.
        assert H % h == 0 and W % w == 0
        kh, kw = H // h, W // w
        if kh == 1 and kw == 1:
            scaled_t = img_t
        else:
            scaled_t = img_t.reshape(C, B, h, kh, w, kw).mean(axis=(3, 5))
        loss = loss + _edge_smoothness_pallas(scaled_t, disp)
        # NOTE: the original module computes `weight /= 2.3` but never uses it.
    return loss


# ------------------------- pure-JAX reference ------------------------------
def _ref_smoothness_loss(img, pred_disp):
    def gx(t):
        return t[:, :, :-1, :] - t[:, :, 1:, :]

    def gy(t):
        return t[:, :, :, :-1] - t[:, :, :, 1:]

    B, C, H, W = img.shape
    loss = 0.0
    for disp in pred_disp:
        _, _, h, w = disp.shape
        kh, kw = H // h, W // w
        scaled = img.reshape(B, C, h, kh, w, kw).mean(axis=(3, 5))
        wx = jnp.exp(-jnp.mean(jnp.abs(gx(scaled)), axis=1, keepdims=True))
        wy = jnp.exp(-jnp.mean(jnp.abs(gy(scaled)), axis=1, keepdims=True))
        loss = loss + jnp.mean(jnp.abs(gx(disp)) * wx) \
                    + jnp.mean(jnp.abs(gy(disp)) * wy)
    return loss


if __name__ == "__main__":
    key = jax.random.PRNGKey(0)
    k_img, k0, k1, k2 = jax.random.split(key, 4)

    B, C, H, W = 2, 3, 32, 32
    img = jax.random.uniform(k_img, (B, C, H, W), jnp.float32)
    # multi-scale disparity pyramid (1 channel each); h != w on the last scale
    # exercises the flattened H- vs W-gradient handling.
    pred_disp = [
        jax.random.uniform(k0, (B, 1, 32, 32), jnp.float32) + 0.1,
        jax.random.uniform(k1, (B, 1, 16, 16), jnp.float32) + 0.1,
        jax.random.uniform(k2, (B, 1, 8, 16), jnp.float32) + 0.1,
    ]

    got = smoothness_loss(img, pred_disp)
    got = jax.block_until_ready(got)
    want = _ref_smoothness_loss(img, pred_disp)

    assert jnp.isfinite(got), "non-finite loss"
    assert jnp.allclose(got, want, rtol=1e-5, atol=1e-5), (
        f"mismatch: pallas={float(got)} ref={float(want)}")
    print("KERNEL_OK")
</pallas_src>

<mosaic_0001>
module attributes {stable_mosaic.version = 11 : i64} {
  func.func @kernel(%arg0: i32, %arg1: memref<1x4x1x256xf32, #tpu.memory_space<vmem>>, %arg2: memref<2x256xf32, #tpu.memory_space<vmem>>, %arg3: memref<1x2x256xf32, #tpu.memory_space<vmem>>) attributes {dimension_semantics = [#tpu.dimension_semantics<parallel>], iteration_bounds = array<i64: 2>, scalar_prefetch = 0 : i64, scratch_operands = 0 : i64, tpu.core_type = #tpu.core_type<tc>, window_params = [{transform_indices = @transform_0, window_bounds = array<i64: 1, 4, 1, 256>}, {pipeline_mode = #tpu.pipeline_mode<synchronous>, transform_indices = @transform_1, window_bounds = array<i64: 2, 256>}, {transform_indices = @transform_2, window_bounds = array<i64: 1, 2, 256>}]} {
    %c0 = arith.constant 0 : index
    %c0_0 = arith.constant 0 : index
    %c0_1 = arith.constant 0 : index
    %c0_2 = arith.constant 0 : index
    %0 = vector.load %arg1[%c0, %c0_0, %c0_1, %c0_2] : memref<1x4x1x256xf32, #tpu.memory_space<vmem>>, vector<1x4x1x256xf32>
    %1 = vector.shape_cast %0 : vector<1x4x1x256xf32> to vector<4x1x256xf32>
    %c240_i32 = arith.constant 240 : i32
    %2 = tpu.dynamic_rotate %1 by %c240_i32 dim 2 : vector<4x1x256xf32>, i32 -> vector<4x1x256xf32>
    %c255_i32 = arith.constant 255 : i32
    %3 = tpu.dynamic_rotate %1 by %c255_i32 dim 2 : vector<4x1x256xf32>, i32 -> vector<4x1x256xf32>
    %4 = arith.subf %1, %2 : vector<4x1x256xf32>
    %5 = math.absf %4 : vector<4x1x256xf32>
    %6 = arith.subf %1, %3 : vector<4x1x256xf32>
    %7 = math.absf %6 : vector<4x1x256xf32>
    %8 = vector.extract_strided_slice %5 {offsets = [0, 0, 0], sizes = [3, 1, 256], strides = [1, 1, 1]} : vector<4x1x256xf32> to vector<3x1x256xf32>
    %cst = arith.constant dense<0.000000e+00> : vector<1x256xf32>
    %9 = vector.multi_reduction <add>, %8, %cst [0] : vector<3x1x256xf32> to vector<1x256xf32>
    %cst_3 = arith.constant 0.000000e+00 : f32
    %10 = vector.broadcast %cst_3 : f32 to vector<1x256xf32>
    %11 = arith.subf %10, %9 : vector<1x256xf32>
    %cst_4 = arith.constant 0.333333343 : f32
    %12 = vector.broadcast %cst_4 : f32 to vector<1x256xf32>
    %13 = arith.mulf %11, %12 : vector<1x256xf32>
    %14 = math.exp %13 : vector<1x256xf32>
    %15 = vector.extract_strided_slice %7 {offsets = [0, 0, 0], sizes = [3, 1, 256], strides = [1, 1, 1]} : vector<4x1x256xf32> to vector<3x1x256xf32>
    %cst_5 = arith.constant dense<0.000000e+00> : vector<1x256xf32>
    %16 = vector.multi_reduction <add>, %15, %cst_5 [0] : vector<3x1x256xf32> to vector<1x256xf32>
    %cst_6 = arith.constant 0.000000e+00 : f32
    %17 = vector.broadcast %cst_6 : f32 to vector<1x256xf32>
    %18 = arith.subf %17, %16 : vector<1x256xf32>
    %cst_7 = arith.constant 0.333333343 : f32
    %19 = vector.broadcast %cst_7 : f32 to vector<1x256xf32>
    %20 = arith.mulf %18, %19 : vector<1x256xf32>
    %21 = math.exp %20 : vector<1x256xf32>
    %c0_8 = arith.constant 0 : index
    %c0_9 = arith.constant 0 : index
    %22 = vector.load %arg2[%c0_8, %c0_9] : memref<2x256xf32, #tpu.memory_space<vmem>>, vector<1x256xf32>
    %23 = arith.mulf %14, %22 : vector<1x256xf32>
    %c1 = arith.constant 1 : index
    %c0_10 = arith.constant 0 : index
    %24 = vector.load %arg2[%c1, %c0_10] : memref<2x256xf32, #tpu.memory_space<vmem>>, vector<1x256xf32>
    %25 = arith.mulf %21, %24 : vector<1x256xf32>
    %26 = vector.extract_strided_slice %5 {offsets = [3, 0, 0], sizes = [1, 1, 256], strides = [1, 1, 1]} : vector<4x1x256xf32> to vector<1x1x256xf32>
    %cst_11 = arith.constant dense<0.000000e+00> : vector<1x256xf32>
    %27 = vector.multi_reduction <add>, %26, %cst_11 [0] : vector<1x1x256xf32> to vector<1x256xf32>
    %28 = arith.mulf %27, %23 : vector<1x256xf32>
    %29 = vector.extract_strided_slice %7 {offsets = [3, 0, 0], sizes = [1, 1, 256], strides = [1, 1, 1]} : vector<4x1x256xf32> to vector<1x1x256xf32>
    %cst_12 = arith.constant dense<0.000000e+00> : vector<1x256xf32>
    %30 = vector.multi_reduction <add>, %29, %cst_12 [0] : vector<1x1x256xf32> to vector<1x256xf32>
    %31 = arith.mulf %30, %25 : vector<1x256xf32>
    %cst_13 = arith.constant dense<0.000000e+00> : vector<256xf32>
    %32 = vector.multi_reduction <add>, %28, %cst_13 [0] : vector<1x256xf32> to vector<256xf32>
    %33 = vector.shape_cast %32 : vector<256xf32> to vector<1x256xf32>
    %c0_14 = arith.constant 0 : index
    %c0_15 = arith.constant 0 : index
    %c0_16 = arith.constant 0 : index
    %34 = vector.load %arg3[%c0_14, %c0_15, %c0_16] : memref<1x2x256xf32, #tpu.memory_space<vmem>>, vector<1x1x256xf32>
    %35 = vector.shape_cast %34 : vector<1x1x256xf32> to vector<1x256xf32>
    %36 = vector.shape_cast %33 : vector<1x256xf32> to vector<1x1x256xf32>
    tpu.vector_store %arg3[%c0_14, %c0_15, %c0_16], %36 {strides = array<i32>} : memref<1x2x256xf32, #tpu.memory_space<vmem>>, vector<1x1x256xf32>,
    %cst_17 = arith.constant dense<0.000000e+00> : vector<256xf32>
    %37 = vector.multi_reduction <add>, %31, %cst_17 [0] : vector<1x256xf32> to vector<256xf32>
    %38 = vector.shape_cast %37 : vector<256xf32> to vector<1x256xf32>
    %c0_18 = arith.constant 0 : index
    %c1_19 = arith.constant 1 : index
    %c0_20 = arith.constant 0 : index
    %39 = vector.load %arg3[%c0_18, %c1_19, %c0_20] : memref<1x2x256xf32, #tpu.memory_space<vmem>>, vector<1x1x256xf32>
    %40 = vector.shape_cast %39 : vector<1x1x256xf32> to vector<1x256xf32>
    %41 = vector.shape_cast %38 : vector<1x256xf32> to vector<1x1x256xf32>
    tpu.vector_store %arg3[%c0_18, %c1_19, %c0_20], %41 {strides = array<i32>} : memref<1x2x256xf32, #tpu.memory_space<vmem>>, vector<1x1x256xf32>,
    return
  }
  func.func @transform_0(%arg0: i32) -> (i32, i32, i32, i32) {
    %c0_i32 = arith.constant 0 : i32
    %c0_i32_0 = arith.constant 0 : i32
    %c0_i32_1 = arith.constant 0 : i32
    %c0_i32_2 = arith.constant 0 : i32
    return %arg0, %c0_i32, %c0_i32_0, %c0_i32_1 : i32, i32, i32, i32
  }
  func.func @transform_1(%arg0: i32) -> (i32, i32) {
    %c0_i32 = arith.constant 0 : i32
    %c0_i32_0 = arith.constant 0 : i32
    %c0_i32_1 = arith.constant 0 : i32
    return %c0_i32, %c0_i32_0 : i32, i32
  }
  func.func @transform_2(%arg0: i32) -> (i32, i32, i32) {
    %c0_i32 = arith.constant 0 : i32
    %c0_i32_0 = arith.constant 0 : i32
    %c0_i32_1 = arith.constant 0 : i32
    return %arg0, %c0_i32, %c0_i32_0 : i32, i32, i32
  }
}

module attributes {stable_mosaic.version = 11 : i64} {
  func.func @kernel(%arg0: i32, %arg1: memref<1x4x1x1024xf32, #tpu.memory_space<vmem>>, %arg2: memref<2x1024xf32, #tpu.memory_space<vmem>>, %arg3: memref<1x2x1024xf32, #tpu.memory_space<vmem>>) attributes {dimension_semantics = [#tpu.dimension_semantics<parallel>], iteration_bounds = array<i64: 2>, scalar_prefetch = 0 : i64, scratch_operands = 0 : i64, tpu.core_type = #tpu.core_type<tc>, window_params = [{transform_indices = @transform_0, window_bounds = array<i64: 1, 4, 1, 1024>}, {pipeline_mode = #tpu.pipeline_mode<synchronous>, transform_indices = @transform_1, window_bounds = array<i64: 2, 1024>}, {transform_indices = @transform_2, window_bounds = array<i64: 1, 2, 1024>}]} {
    %c0 = arith.constant 0 : index
    %c0_0 = arith.constant 0 : index
    %c0_1 = arith.constant 0 : index
    %c0_2 = arith.constant 0 : index
    %0 = vector.load %arg1[%c0, %c0_0, %c0_1, %c0_2] : memref<1x4x1x1024xf32, #tpu.memory_space<vmem>>, vector<1x4x1x1024xf32>
    %1 = vector.shape_cast %0 : vector<1x4x1x1024xf32> to vector<4x1x1024xf32>
    %c992_i32 = arith.constant 992 : i32
    %2 = tpu.dynamic_rotate %1 by %c992_i32 dim 2 : vector<4x1x1024xf32>, i32 -> vector<4x1x1024xf32>
    %c1023_i32 = arith.constant 1023 : i32
    %3 = tpu.dynamic_rotate %1 by %c1023_i32 dim 2 : vector<4x1x1024xf32>, i32 -> vector<4x1x1024xf32>
    %4 = arith.subf %1, %2 : vector<4x1x1024xf32>
    %5 = math.absf %4 : vector<4x1x1024xf32>
    %6 = arith.subf %1, %3 : vector<4x1x1024xf32>
    %7 = math.absf %6 : vector<4x1x1024xf32>
    %8 = vector.extract_strided_slice %5 {offsets = [0, 0, 0], sizes = [3, 1, 1024], strides = [1, 1, 1]} : vector<4x1x1024xf32> to vector<3x1x1024xf32>
    %cst = arith.constant dense<0.000000e+00> : vector<1x1024xf32>
    %9 = vector.multi_reduction <add>, %8, %cst [0] : vector<3x1x1024xf32> to vector<1x1024xf32>
    %cst_3 = arith.constant 0.000000e+00 : f32
    %10 = vector.broadcast %cst_3 : f32 to vector<1x1024xf32>
    %11 = arith.subf %10, %9 : vector<1x1024xf32>
    %cst_4 = arith.constant 0.333333343 : f32
    %12 = vector.broadcast %cst_4 : f32 to vector<1x1024xf32>
    %13 = arith.mulf %11, %12 : vector<1x1024xf32>
    %14 = math.exp %13 : vector<1x1024xf32>
    %15 = vector.extract_strided_slice %7 {offsets = [0, 0, 0], sizes = [3, 1, 1024], strides = [1, 1, 1]} : vector<4x1x1024xf32> to vector<3x1x1024xf32>
    %cst_5 = arith.constant dense<0.000000e+00> : vector<1x1024xf32>
    %16 = vector.multi_reduction <add>, %15, %cst_5 [0] : vector<3x1x1024xf32> to vector<1x1024xf32>
    %cst_6 = arith.constant 0.000000e+00 : f32
    %17 = vector.broadcast %cst_6 : f32 to vector<1x1024xf32>
    %18 = arith.subf %17, %16 : vector<1x1024xf32>
    %cst_7 = arith.constant 0.333333343 : f32
    %19 = vector.broadcast %cst_7 : f32 to vector<1x1024xf32>
    %20 = arith.mulf %18, %19 : vector<1x1024xf32>
    %21 = math.exp %20 : vector<1x1024xf32>
    %c0_8 = arith.constant 0 : index
    %c0_9 = arith.constant 0 : index
    %22 = vector.load %arg2[%c0_8, %c0_9] : memref<2x1024xf32, #tpu.memory_space<vmem>>, vector<1x1024xf32>
    %23 = arith.mulf %14, %22 : vector<1x1024xf32>
    %c1 = arith.constant 1 : index
    %c0_10 = arith.constant 0 : index
    %24 = vector.load %arg2[%c1, %c0_10] : memref<2x1024xf32, #tpu.memory_space<vmem>>, vector<1x1024xf32>
    %25 = arith.mulf %21, %24 : vector<1x1024xf32>
    %26 = vector.extract_strided_slice %5 {offsets = [3, 0, 0], sizes = [1, 1, 1024], strides = [1, 1, 1]} : vector<4x1x1024xf32> to vector<1x1x1024xf32>
    %cst_11 = arith.constant dense<0.000000e+00> : vector<1x1024xf32>
    %27 = vector.multi_reduction <add>, %26, %cst_11 [0] : vector<1x1x1024xf32> to vector<1x1024xf32>
    %28 = arith.mulf %27, %23 : vector<1x1024xf32>
    %29 = vector.extract_strided_slice %7 {offsets = [3, 0, 0], sizes = [1, 1, 1024], strides = [1, 1, 1]} : vector<4x1x1024xf32> to vector<1x1x1024xf32>
    %cst_12 = arith.constant dense<0.000000e+00> : vector<1x1024xf32>
    %30 = vector.multi_reduction <add>, %29, %cst_12 [0] : vector<1x1x1024xf32> to vector<1x1024xf32>
    %31 = arith.mulf %30, %25 : vector<1x1024xf32>
    %cst_13 = arith.constant dense<0.000000e+00> : vector<1024xf32>
    %32 = vector.multi_reduction <add>, %28, %cst_13 [0] : vector<1x1024xf32> to vector<1024xf32>
    %33 = vector.shape_cast %32 : vector<1024xf32> to vector<1x1024xf32>
    %c0_14 = arith.constant 0 : index
    %c0_15 = arith.constant 0 : index
    %c0_16 = arith.constant 0 : index
    %34 = vector.load %arg3[%c0_14, %c0_15, %c0_16] : memref<1x2x1024xf32, #tpu.memory_space<vmem>>, vector<1x1x1024xf32>
    %35 = vector.shape_cast %34 : vector<1x1x1024xf32> to vector<1x1024xf32>
    %36 = vector.shape_cast %33 : vector<1x1024xf32> to vector<1x1x1024xf32>
    tpu.vector_store %arg3[%c0_14, %c0_15, %c0_16], %36 {strides = array<i32>} : memref<1x2x1024xf32, #tpu.memory_space<vmem>>, vector<1x1x1024xf32>,
    %cst_17 = arith.constant dense<0.000000e+00> : vector<1024xf32>
    %37 = vector.multi_reduction <add>, %31, %cst_17 [0] : vector<1x1024xf32> to vector<1024xf32>
    %38 = vector.shape_cast %37 : vector<1024xf32> to vector<1x1024xf32>
    %c0_18 = arith.constant 0 : index
    %c1_19 = arith.constant 1 : index
    %c0_20 = arith.constant 0 : index
    %39 = vector.load %arg3[%c0_18, %c1_19, %c0_20] : memref<1x2x1024xf32, #tpu.memory_space<vmem>>, vector<1x1x1024xf32>
    %40 = vector.shape_cast %39 : vector<1x1x1024xf32> to vector<1x1024xf32>
    %41 = vector.shape_cast %38 : vector<1x1024xf32> to vector<1x1x1024xf32>
    tpu.vector_store %arg3[%c0_18, %c1_19, %c0_20], %41 {strides = array<i32>} : memref<1x2x1024xf32, #tpu.memory_space<vmem>>, vector<1x1x1024xf32>,
    return
  }
  func.func @transform_0(%arg0: i32) -> (i32, i32, i32, i32) {
    %c0_i32 = arith.constant 0 : i32
    %c0_i32_0 = arith.constant 0 : i32
    %c0_i32_1 = arith.constant 0 : i32
    %c0_i32_2 = arith.constant 0 : i32
    return %arg0, %c0_i32, %c0_i32_0, %c0_i32_1 : i32, i32, i32, i32
  }
  func.func @transform_1(%arg0: i32) -> (i32, i32) {
    %c0_i32 = arith.constant 0 : i32
    %c0_i32_0 = arith.constant 0 : i32
    %c0_i32_1 = arith.constant 0 : i32
    return %c0_i32, %c0_i32_0 : i32, i32
  }
  func.func @transform_2(%arg0: i32) -> (i32, i32, i32) {
    %c0_i32 = arith.constant 0 : i32
    %c0_i32_0 = arith.constant 0 : i32
    %c0_i32_1 = arith.constant 0 : i32
    return %arg0, %c0_i32, %c0_i32_0 : i32, i32, i32
  }
}

module attributes {stable_mosaic.version = 11 : i64} {
  func.func @kernel(%arg0: i32, %arg1: memref<1x4x1x128xf32, #tpu.memory_space<vmem>>, %arg2: memref<2x128xf32, #tpu.memory_space<vmem>>, %arg3: memref<1x2x128xf32, #tpu.memory_space<vmem>>) attributes {dimension_semantics = [#tpu.dimension_semantics<parallel>], iteration_bounds = array<i64: 2>, scalar_prefetch = 0 : i64, scratch_operands = 0 : i64, tpu.core_type = #tpu.core_type<tc>, window_params = [{transform_indices = @transform_0, window_bounds = array<i64: 1, 4, 1, 128>}, {pipeline_mode = #tpu.pipeline_mode<synchronous>, transform_indices = @transform_1, window_bounds = array<i64: 2, 128>}, {transform_indices = @transform_2, window_bounds = array<i64: 1, 2, 128>}]} {
    %c0 = arith.constant 0 : index
    %c0_0 = arith.constant 0 : index
    %c0_1 = arith.constant 0 : index
    %c0_2 = arith.constant 0 : index
    %0 = vector.load %arg1[%c0, %c0_0, %c0_1, %c0_2] : memref<1x4x1x128xf32, #tpu.memory_space<vmem>>, vector<1x4x1x128xf32>
    %1 = vector.shape_cast %0 : vector<1x4x1x128xf32> to vector<4x1x128xf32>
    %c112_i32 = arith.constant 112 : i32
    %2 = tpu.dynamic_rotate %1 by %c112_i32 dim 2 : vector<4x1x128xf32>, i32 -> vector<4x1x128xf32>
    %c127_i32 = arith.constant 127 : i32
    %3 = tpu.dynamic_rotate %1 by %c127_i32 dim 2 : vector<4x1x128xf32>, i32 -> vector<4x1x128xf32>
    %4 = arith.subf %1, %2 : vector<4x1x128xf32>
    %5 = math.absf %4 : vector<4x1x128xf32>
    %6 = arith.subf %1, %3 : vector<4x1x128xf32>
    %7 = math.absf %6 : vector<4x1x128xf32>
    %8 = vector.extract_strided_slice %5 {offsets = [0, 0, 0], sizes = [3, 1, 128], strides = [1, 1, 1]} : vector<4x1x128xf32> to vector<3x1x128xf32>
    %cst = arith.constant dense<0.000000e+00> : vector<1x128xf32>
    %9 = vector.multi_reduction <add>, %8, %cst [0] : vector<3x1x128xf32> to vector<1x128xf32>
    %cst_3 = arith.constant 0.000000e+00 : f32
    %10 = vector.broadcast %cst_3 : f32 to vector<1x128xf32>
    %11 = arith.subf %10, %9 : vector<1x128xf32>
    %cst_4 = arith.constant 0.333333343 : f32
    %12 = vector.broadcast %cst_4 : f32 to vector<1x128xf32>
    %13 = arith.mulf %11, %12 : vector<1x128xf32>
    %14 = math.exp %13 : vector<1x128xf32>
    %15 = vector.extract_strided_slice %7 {offsets = [0, 0, 0], sizes = [3, 1, 128], strides = [1, 1, 1]} : vector<4x1x128xf32> to vector<3x1x128xf32>
    %cst_5 = arith.constant dense<0.000000e+00> : vector<1x128xf32>
    %16 = vector.multi_reduction <add>, %15, %cst_5 [0] : vector<3x1x128xf32> to vector<1x128xf32>
    %cst_6 = arith.constant 0.000000e+00 : f32
    %17 = vector.broadcast %cst_6 : f32 to vector<1x128xf32>
    %18 = arith.subf %17, %16 : vector<1x128xf32>
    %cst_7 = arith.constant 0.333333343 : f32
    %19 = vector.broadcast %cst_7 : f32 to vector<1x128xf32>
    %20 = arith.mulf %18, %19 : vector<1x128xf32>
    %21 = math.exp %20 : vector<1x128xf32>
    %c0_8 = arith.constant 0 : index
    %c0_9 = arith.constant 0 : index
    %22 = vector.load %arg2[%c0_8, %c0_9] : memref<2x128xf32, #tpu.memory_space<vmem>>, vector<1x128xf32>
    %23 = arith.mulf %14, %22 : vector<1x128xf32>
    %c1 = arith.constant 1 : index
    %c0_10 = arith.constant 0 : index
    %24 = vector.load %arg2[%c1, %c0_10] : memref<2x128xf32, #tpu.memory_space<vmem>>, vector<1x128xf32>
    %25 = arith.mulf %21, %24 : vector<1x128xf32>
    %26 = vector.extract_strided_slice %5 {offsets = [3, 0, 0], sizes = [1, 1, 128], strides = [1, 1, 1]} : vector<4x1x128xf32> to vector<1x1x128xf32>
    %cst_11 = arith.constant dense<0.000000e+00> : vector<1x128xf32>
    %27 = vector.multi_reduction <add>, %26, %cst_11 [0] : vector<1x1x128xf32> to vector<1x128xf32>
    %28 = arith.mulf %27, %23 : vector<1x128xf32>
    %29 = vector.extract_strided_slice %7 {offsets = [3, 0, 0], sizes = [1, 1, 128], strides = [1, 1, 1]} : vector<4x1x128xf32> to vector<1x1x128xf32>
    %cst_12 = arith.constant dense<0.000000e+00> : vector<1x128xf32>
    %30 = vector.multi_reduction <add>, %29, %cst_12 [0] : vector<1x1x128xf32> to vector<1x128xf32>
    %31 = arith.mulf %30, %25 : vector<1x128xf32>
    %cst_13 = arith.constant dense<0.000000e+00> : vector<128xf32>
    %32 = vector.multi_reduction <add>, %28, %cst_13 [0] : vector<1x128xf32> to vector<128xf32>
    %33 = vector.shape_cast %32 : vector<128xf32> to vector<1x128xf32>
    %c0_14 = arith.constant 0 : index
    %c0_15 = arith.constant 0 : index
    %c0_16 = arith.constant 0 : index
    %34 = vector.load %arg3[%c0_14, %c0_15, %c0_16] : memref<1x2x128xf32, #tpu.memory_space<vmem>>, vector<1x1x128xf32>
    %35 = vector.shape_cast %34 : vector<1x1x128xf32> to vector<1x128xf32>
    %36 = vector.shape_cast %33 : vector<1x128xf32> to vector<1x1x128xf32>
    tpu.vector_store %arg3[%c0_14, %c0_15, %c0_16], %36 {strides = array<i32>} : memref<1x2x128xf32, #tpu.memory_space<vmem>>, vector<1x1x128xf32>,
    %cst_17 = arith.constant dense<0.000000e+00> : vector<128xf32>
    %37 = vector.multi_reduction <add>, %31, %cst_17 [0] : vector<1x128xf32> to vector<128xf32>
    %38 = vector.shape_cast %37 : vector<128xf32> to vector<1x128xf32>
    %c0_18 = arith.constant 0 : index
    %c1_19 = arith.constant 1 : index
    %c0_20 = arith.constant 0 : index
    %39 = vector.load %arg3[%c0_18, %c1_19, %c0_20] : memref<1x2x128xf32, #tpu.memory_space<vmem>>, vector<1x1x128xf32>
    %40 = vector.shape_cast %39 : vector<1x1x128xf32> to vector<1x128xf32>
    %41 = vector.shape_cast %38 : vector<1x128xf32> to vector<1x1x128xf32>
    tpu.vector_store %arg3[%c0_18, %c1_19, %c0_20], %41 {strides = array<i32>} : memref<1x2x128xf32, #tpu.memory_space<vmem>>, vector<1x1x128xf32>,
    return
  }
  func.func @transform_0(%arg0: i32) -> (i32, i32, i32, i32) {
    %c0_i32 = arith.constant 0 : i32
    %c0_i32_0 = arith.constant 0 : i32
    %c0_i32_1 = arith.constant 0 : i32
    %c0_i32_2 = arith.constant 0 : i32
    return %arg0, %c0_i32, %c0_i32_0, %c0_i32_1 : i32, i32, i32, i32
  }
  func.func @transform_1(%arg0: i32) -> (i32, i32) {
    %c0_i32 = arith.constant 0 : i32
    %c0_i32_0 = arith.constant 0 : i32
    %c0_i32_1 = arith.constant 0 : i32
    return %c0_i32, %c0_i32_0 : i32, i32
  }
  func.func @transform_2(%arg0: i32) -> (i32, i32, i32) {
    %c0_i32 = arith.constant 0 : i32
    %c0_i32_0 = arith.constant 0 : i32
    %c0_i32_1 = arith.constant 0 : i32
    return %arg0, %c0_i32, %c0_i32_0 : i32, i32, i32
  }
}

</mosaic_0001>

<llo_original>
// kernel: smoothness_loss.4
$region0: #{smoothness_loss.4}
  #allocation0 [shape = 'u32[]', space=smem, size = 0x4, offset = 0x4, fixed_abs, tag = 'smem constant byte address 0x4 - core index']
  #allocation1 [shape = 'u32[144,128]{1,0:T(1,128)}', space=vmem, size = 0x12000, scoped, tag = 'internal scratch']
  %s0 = inlined_call_operand.vmem [shape: f32[2,4,1,256], index: 0, kind: input, shape index: {}]
  %s1 = inlined_call_operand.vmem [shape: f32[2,256], index: 1, kind: input, shape index: {}]
  %s2 = inlined_call_operand.vmem [shape: f32[2,2,256], index: 2, kind: output, shape index: {}]
  %s3 = sld [smem:[#allocation0]]
  $region41: #{smoothness_loss.4} parent=0
    _
  %s5 = ssub.s32 1, %s3
  %s6 = scalar_select 0, %s5, %s3
  loop: start=0, step=1, limit=4
  $region2: #{smoothness_loss.4} parent=0 // loop_pre_header
    _
  $region3: #{smoothness_loss.4} parent=0 // loop_header
    %s8 = sphi 0, %s12
    %p9 = scmp.ge.s32.totalorder %s8, 4
    %s18 = sphi 0, %s20
    %s21 = sphi 0, %s18
    %s22 = sphi 0, %s21
    %s38 = sphi 0, %s22
    %s42 = sphi 0, %s42
    %s44 = sphi 0, %s42
    %s45 = sphi 0, %s44
    %s59 = sphi 0, %s45
    %s65 = sphi 0, %s67
    %s68 = sphi 0, %s65
    %s69 = sphi 0, %s68
    %s85 = sphi 0, %s69
  $region4: #{smoothness_loss.4} parent=0 // loop_header_branch
    %11 = sbr.rel (%p9) target = $region8
  $region5: #{smoothness_loss.4} parent=0 // loop_body
    %s13 = ssub.s32 %s8, 1
    %s14 = ssub.s32 %s8, 2
    %s15 = sadd.s32 %s8, 1
    %s16 = ssub.s32 %s8, %s15
    %p17 = scmp.eq.s32.totalorder %s16, 0
    %s19 = sadd.s32 %s18, 1
    %s20 = scalar_select %p17, %s18, %s19
    %p23 = pneg %p17
    %p24 = scmp.eq.s32.totalorder %s8, 1
    %p25 = por %p23, %p24
    %p26 = scmp.ne.s32.totalorder %s18, %s21
    %p27 = scmp.eq.s32.totalorder %s8, 0
    %p28 = por %p26, %p27
    %p29 = scmp.ne.s32.totalorder %s18, %s21
    %p30 = scmp.eq.s32.totalorder %s13, 1
    %p31 = por %p29, %p30
    %p32 = scmp.ne.s32.totalorder %s21, %s22
    %p33 = scmp.eq.s32.totalorder %s13, 0
    %p34 = por %p32, %p33
    %p35 = scmp.ne.s32.totalorder %s21, %s22
    %p36 = scmp.eq.s32.totalorder %s14, 1
    %p37 = por %p35, %p36
    %p39 = scmp.ne.s32.totalorder %s22, %s38
    %p40 = scmp.eq.s32.totalorder %s14, 0
    %p41 = por %p39, %p40
    %s43 = sadd.s32 %s42, 1
    %p46 = scmp.eq.s32.totalorder %s8, 1
    %p47 = scmp.ne.s32.totalorder %s42, %s44
    %p48 = scmp.eq.s32.totalorder %s8, 0
    %p49 = por %p47, %p48
    %p50 = scmp.ne.s32.totalorder %s42, %s44
    %p51 = scmp.eq.s32.totalorder %s13, 1
    %p52 = por %p50, %p51
    %p53 = scmp.ne.s32.totalorder %s44, %s45
    %p54 = scmp.eq.s32.totalorder %s13, 0
    %p55 = por %p53, %p54
    %p56 = scmp.ne.s32.totalorder %s44, %s45
    %p57 = scmp.eq.s32.totalorder %s14, 1
    %p58 = por %p56, %p57
    %p60 = scmp.ne.s32.totalorder %s45, %s59
    %p61 = scmp.eq.s32.totalorder %s14, 0
    %p62 = por %p60, %p61
    %s63 = ssub.s32 %s8, %s15
    %p64 = scmp.eq.s32.totalorder %s63, 0
    %s66 = sadd.s32 %s65, 1
    %s67 = scalar_select %p64, %s65, %s66
    %p70 = pneg %p64
    %p71 = scmp.eq.s32.totalorder %s8, 1
    %p72 = por %p70, %p71
    %p73 = scmp.ne.s32.totalorder %s65, %s68
    %p74 = scmp.eq.s32.totalorder %s8, 0
    %p75 = por %p73, %p74
    %p76 = scmp.ne.s32.totalorder %s65, %s68
    %p77 = scmp.eq.s32.totalorder %s13, 1
    %p78 = por %p76, %p77
    %p79 = scmp.ne.s32.totalorder %s68, %s69
    %p80 = scmp.eq.s32.totalorder %s13, 0
    %p81 = por %p79, %p80
    %p82 = scmp.ne.s32.totalorder %s68, %s69
    %p83 = scmp.eq.s32.totalorder %s14, 1
    %p84 = por %p82, %p83
    %p86 = scmp.ne.s32.totalorder %s69, %s85
    %p87 = scmp.eq.s32.totalorder %s14, 0
    %p88 = por %p86, %p87
    %p89 = scmp.le.s32.totalorder 1, %s8
    %p90 = scmp.lt.s32.totalorder %s8, 3
    %p91 = pnand %p89, %p90
    %p92 = pneg %p91
    // Predicated region
    $region9: #{smoothness_loss.4} parent=5 // pred_check
      _
    $region10: #{smoothness_loss.4} parent=5 // pred_check_branch
      %94 = sbr.rel (%p91) target = $region12
    $region11: #{smoothness_loss.4} parent=5 // pred_region
      %s95 = ssub.s32 %s8, 1
      // Predicated region
      $region13: #{smoothness_loss.4} parent=11 // pred_check
        %p96 = pneg %p55
      $region14: #{smoothness_loss.4} parent=11 // pred_check_branch
        %98 = sbr.rel (%p96) target = $region16
      $region15: #{smoothness_loss.4} parent=11 // pred_region
        _
      $region16: #{smoothness_loss.4} parent=11 // pred_fallthru
        _
    $region12: #{smoothness_loss.4} parent=5 // pred_fallthru
      _
    %p99 = scmp.lt.s32.totalorder %s8, 2
    // Predicated region
    $region17: #{smoothness_loss.4} parent=5 // pred_check
      %p100 = pneg %p99
    $region18: #{smoothness_loss.4} parent=5 // pred_check_branch
      %102 = sbr.rel (%p100) target = $region20
    $region19: #{smoothness_loss.4} parent=5 // pred_region
      // Predicated region
      $region21: #{smoothness_loss.4} parent=19 // pred_check
        %p103 = pneg %p28
      $region22: #{smoothness_loss.4} parent=19 // pred_check_branch
        %105 = sbr.rel (%p103) target = $region24
      $region23: #{smoothness_loss.4} parent=19 // pred_region
        %p106 = scmp.lt.s32.totalorder %s8, 1
        %s107 = scalar_select %p106, %s8, 1
        %s108 = smul.addr %s107, 8
        %s109 = scalar_lea.vmem %s0, %s108
      $region24: #{smoothness_loss.4} parent=19 // pred_fallthru
        _
    $region20: #{smoothness_loss.4} parent=5 // pred_fallthru
      _
    %p110 = scmp.le.s32.totalorder 1, %s8
    %p111 = scmp.lt.s32.totalorder %s8, 3
    %p112 = pnand %p110, %p111
    %p113 = pneg %p112
    // Predicated region
    $region25: #{smoothness_loss.4} parent=5 // pred_check
      _
    $region26: #{smoothness_loss.4} parent=5 // pred_check_branch
      %115 = sbr.rel (%p112) target = $region28
    $region27: #{smoothness_loss.4} parent=5 // pred_region
      %s116 = ssub.s32 %s8, 1
      %p117 = scmp.lt.s32.totalorder %s13, 1
      %s118 = scalar_select %p117, %s13, 1
      %s119 = smul.addr %s118, 8
      %s120 = scalar_lea.vmem %s0, %s119
      %p121 = pneg %p34
      %p122 = pneg %p31
      %p123 = pneg %p55
      %p124 = pneg %p52
      %p125 = pneg %p81
      %p126 = pneg %p78
      %p127 = scmp.lt.s32.totalorder %s13, 1
      %s128 = scalar_select %p127, %s13, 1
      %s129 = smul.addr %s128, 2
      %s130 = smul.addr %s129, 2
      %s131 = scalar_lea.vmem %s2, %s130
      %p132 = scmp.lt.s32.totalorder %s13, 1
      %s133 = scalar_select %p132, %s13, 1
      %s134 = smul.addr %s133, 8
      %s135 = scalar_lea.vmem %s0, %s134
      %p136 = scmp.lt.s32.totalorder %s13, 1
      %s137 = scalar_select %p136, %s13, 1
      %s138 = smul.addr %s137, 2
      %s139 = smul.addr %s138, 2
      %s140 = scalar_lea.vmem %s2, %s139
      %v141 = vld [vmem:[%s135] sm:$0x3]
      %v142 = vld [vmem:[%s135 + $0x2] sm:$0x3]
      %v143 = vld [vmem:[%s135 + $0x4] sm:$0x3]
      %v144 = vld [vmem:[%s135 + $0x6] sm:$0x3]
      %v149 = vlaneseq
      %v150 = vshrl.u32 %v149, 7
      %v151 = vsub.s32 0, %v150
      %v152 = vrot.slane %v141, %v151
      %v153 = vlaneseq
      %v154 = vshrl.u32 %v153, 7
      %v155 = vsub.s32 1, %v154
      %v156 = vrot.slane %v141, %v155
      %v157 = vlaneseq
      %v158 = vshrl.u32 %v157, 7
      %v159 = vsub.s32 0, %v158
      %v160 = vrot.slane %v142, %v159
      %v161 = vlaneseq
      %v162 = vshrl.u32 %v161, 7
      %v163 = vsub.s32 1, %v162
      %v164 = vrot.slane %v142, %v163
      %v165 = vlaneseq
      %v166 = vshrl.u32 %v165, 7
      %v167 = vsub.s32 0, %v166
      %v168 = vrot.slane %v143, %v167
      %v169 = vlaneseq
      %v170 = vshrl.u32 %v169, 7
      %v171 = vsub.s32 1, %v170
      %v172 = vrot.slane %v143, %v171
      %v173 = vlaneseq
      %v174 = vshrl.u32 %v173, 7
      %v175 = vsub.s32 0, %v174
      %v176 = vrot.slane %v144, %v175
      %v177 = vlaneseq
      %v178 = vshrl.u32 %v177, 7
      %v179 = vsub.s32 1, %v178
      %v180 = vrot.slane %v144, %v179
      %189 = vrot.lane.b32.xlu0 %v152, 112
      %v190 = vpop.permute.xlu0 %189
      %191 = vrot.lane.b32.xlu0 %v160, 112
      %v192 = vpop.permute.xlu0 %191
      %193 = vrot.lane.b32.xlu0 %v168, 112
      %v194 = vpop.permute.xlu0 %193
      %195 = vrot.lane.b32.xlu0 %v176, 112
      %v196 = vpop.permute.xlu0 %195
      %197 = vrot.lane.b32.xlu0 %v156, 112
      %v198 = vpop.permute.xlu0 %197
      %199 = vrot.lane.b32.xlu0 %v164, 112
      %v200 = vpop.permute.xlu0 %199
      %201 = vrot.lane.b32.xlu0 %v172, 112
      %v202 = vpop.permute.xlu0 %201
      %203 = vrot.lane.b32.xlu0 %v180, 112
      %v204 = vpop.permute.xlu0 %203
      %v205 = vlaneseq
      %v206 = vand.u32 %v205, 127
      %vm207 = vcmp.lt.s32.totalorder %v206, 112
      %v208 = vsel %vm207, %v190, %v198
      %v209 = vsel %vm207, %v192, %v200
      %v210 = vsel %vm207, %v194, %v202
      %v211 = vsel %vm207, %v196, %v204
      %v212 = vsel %vm207, %v198, %v190
      %v213 = vsel %vm207, %v200, %v192
      %v214 = vsel %vm207, %v202, %v194
      %v215 = vsel %vm207, %v204, %v196
      %216 = vrot.lane.b32.xlu0 %v152, 127
      %v217 = vpop.permute.xlu0 %216
      %218 = vrot.lane.b32.xlu0 %v160, 127
      %v219 = vpop.permute.xlu0 %218
      %220 = vrot.lane.b32.xlu0 %v168, 127
      %v221 = vpop.permute.xlu0 %220
      %222 = vrot.lane.b32.xlu0 %v176, 127
      %v223 = vpop.permute.xlu0 %222
      %224 = vrot.lane.b32.xlu0 %v156, 127
      %v225 = vpop.permute.xlu0 %224
      %226 = vrot.lane.b32.xlu0 %v164, 127
      %v227 = vpop.permute.xlu0 %226
      %228 = vrot.lane.b32.xlu0 %v172, 127
      %v229 = vpop.permute.xlu0 %228
      %230 = vrot.lane.b32.xlu0 %v180, 127
      %v231 = vpop.permute.xlu0 %230
      %vm232 = vcmp.lt.s32.totalorder %v206, 127
      %v233 = vsel %vm232, %v217, %v225
      %v234 = vsel %vm232, %v219, %v227
      %v235 = vsel %vm232, %v221, %v229
      %v236 = vsel %vm232, %v223, %v231
      %v237 = vsel %vm232, %v225, %v217
      %v238 = vsel %vm232, %v227, %v219
      %v239 = vsel %vm232, %v229, %v221
      %v240 = vsel %vm232, %v231, %v223
      %v249 = vcombine.low %v208, %v212
      %v251 = vunpack.c.l.s4 1966171168
      %v252 = vunpack.c.0.s8 %v251
      %v253 = vlaneseq
      %v254 = vshrl.u32 %v253, 7
      %v255 = vsub.s32 %v252, %v254
      %v256 = vrot.slane %v249, %v255
      %v258 = vunpack.c.l.s4 1966171168
      %v259 = vunpack.c.0.s8 %v258
      %v260 = vlaneseq
      %v261 = vshrl.u32 %v260, 7
      %v262 = vsub.s32 %v259, %v261
      %v263 = vrot.slane %v256, %v262
      %v264 = vcombine.low %v209, %v213
      %v266 = vunpack.c.l.s4 1966171168
      %v267 = vunpack.c.0.s8 %v266
      %v268 = vlaneseq
      %v269 = vshrl.u32 %v268, 7
      %v270 = vsub.s32 %v267, %v269
      %v271 = vrot.slane %v264, %v270
      %v273 = vunpack.c.l.s4 1966171168
      %v274 = vunpack.c.0.s8 %v273
      %v275 = vlaneseq
      %v276 = vshrl.u32 %v275, 7
      %v277 = vsub.s32 %v274, %v276
      %v278 = vrot.slane %v271, %v277
      %v279 = vcombine.low %v210, %v214
      %v281 = vunpack.c.l.s4 1966171168
      %v282 = vunpack.c.0.s8 %v281
      %v283 = vlaneseq
      %v284 = vshrl.u32 %v283, 7
      %v285 = vsub.s32 %v282, %v284
      %v286 = vrot.slane %v279, %v285
      %v288 = vunpack.c.l.s4 1966171168
      %v289 = vunpack.c.0.s8 %v288
      %v290 = vlaneseq
      %v291 = vshrl.u32 %v290, 7
      %v292 = vsub.s32 %v289, %v291
      %v293 = vrot.slane %v286, %v292
      %v294 = vcombine.low %v211, %v215
      %v296 = vunpack.c.l.s4 1966171168
      %v297 = vunpack.c.0.s8 %v296
      %v298 = vlaneseq
      %v299 = vshrl.u32 %v298, 7
      %v300 = vsub.s32 %v297, %v299
      %v301 = vrot.slane %v294, %v300
      %v303 = vunpack.c.l.s4 1966171168
      %v304 = vunpack.c.0.s8 %v303
      %v305 = vlaneseq
      %v306 = vshrl.u32 %v305, 7
      %v307 = vsub.s32 %v304, %v306
      %v308 = vrot.slane %v301, %v307
      %v313 = vsub.f32 %v141, %v263
      %v314 = vsub.f32 %v142, %v278
      %v315 = vsub.f32 %v143, %v293
      %v316 = vsub.f32 %v144, %v308
      %v317 = vand.u32 2147483647, %v313
      %v318 = vand.u32 2147483647, %v314
      %v319 = vand.u32 2147483647, %v315
      %v320 = vand.u32 2147483647, %v316
      %v329 = vcombine.low %v233, %v237
      %v331 = vunpack.c.l.s4 1966171168
      %v332 = vunpack.c.0.s8 %v331
      %v333 = vlaneseq
      %v334 = vshrl.u32 %v333, 7
      %v335 = vsub.s32 %v332, %v334
      %v336 = vrot.slane %v329, %v335
      %v338 = vunpack.c.l.s4 1966171168
      %v339 = vunpack.c.0.s8 %v338
      %v340 = vlaneseq
      %v341 = vshrl.u32 %v340, 7
      %v342 = vsub.s32 %v339, %v341
      %v343 = vrot.slane %v336, %v342
      %v344 = vcombine.low %v234, %v238
      %v346 = vunpack.c.l.s4 1966171168
      %v347 = vunpack.c.0.s8 %v346
      %v348 = vlaneseq
      %v349 = vshrl.u32 %v348, 7
      %v350 = vsub.s32 %v347, %v349
      %v351 = vrot.slane %v344, %v350
      %v353 = vunpack.c.l.s4 1966171168
      %v354 = vunpack.c.0.s8 %v353
      %v355 = vlaneseq
      %v356 = vshrl.u32 %v355, 7
      %v357 = vsub.s32 %v354, %v356
      %v358 = vrot.slane %v351, %v357
      %v359 = vcombine.low %v235, %v239
      %v361 = vunpack.c.l.s4 1966171168
      %v362 = vunpack.c.0.s8 %v361
      %v363 = vlaneseq
      %v364 = vshrl.u32 %v363, 7
      %v365 = vsub.s32 %v362, %v364
      %v366 = vrot.slane %v359, %v365
      %v368 = vunpack.c.l.s4 1966171168
      %v369 = vunpack.c.0.s8 %v368
      %v370 = vlaneseq
      %v371 = vshrl.u32 %v370, 7
      %v372 = vsub.s32 %v369, %v371
      %v373 = vrot.slane %v366, %v372
      %v374 = vcombine.low %v236, %v240
      %v376 = vunpack.c.l.s4 1966171168
      %v377 = vunpack.c.0.s8 %v376
      %v378 = vlaneseq
      %v379 = vshrl.u32 %v378, 7
      %v380 = vsub.s32 %v377, %v379
      %v381 = vrot.slane %v374, %v380
      %v383 = vunpack.c.l.s4 1966171168
      %v384 = vunpack.c.0.s8 %v383
      %v385 = vlaneseq
      %v386 = vshrl.u32 %v385, 7
      %v387 = vsub.s32 %v384, %v386
      %v388 = vrot.slane %v381, %v387
      %v393 = vsub.f32 %v141, %v343
      %v394 = vsub.f32 %v142, %v358
      %v395 = vsub.f32 %v143, %v373
      %v396 = vsub.f32 %v144, %v388
      %v397 = vand.u32 2147483647, %v393
      %v398 = vand.u32 2147483647, %v394
      %v399 = vand.u32 2147483647, %v395
      %v400 = vand.u32 2147483647, %v396
      %v404 = vlaneseq
      %v405 = vshrl.u32 %v404, 7
      %v406 = vsub.s32 0, %v405
      %v407 = vrot.slane %v317, %v406
      %v408 = vlaneseq
      %v409 = vshrl.u32 %v408, 7
      %v410 = vsub.s32 1, %v409
      %v411 = vrot.slane %v317, %v410
      %v412 = vlaneseq
      %v413 = vshrl.u32 %v412, 7
      %v414 = vsub.s32 0, %v413
      %v415 = vrot.slane %v318, %v414
      %v416 = vlaneseq
      %v417 = vshrl.u32 %v416, 7
      %v418 = vsub.s32 1, %v417
      %v419 = vrot.slane %v318, %v418
      %v420 = vlaneseq
      %v421 = vshrl.u32 %v420, 7
      %v422 = vsub.s32 0, %v421
      %v423 = vrot.slane %v319, %v422
      %v424 = vlaneseq
      %v425 = vshrl.u32 %v424, 7
      %v426 = vsub.s32 1, %v425
      %v427 = vrot.slane %v319, %v426
      %vm434 = vcmask 1040384
      %v435 = vsel %vm434, %v407, 0.0
      %v436 = vsel %vm434, %v415, 0.0
      %v437 = vadd.f32 %v435, %v436
      %v438 = vsel %vm434, %v423, 0.0
      %v439 = vadd.f32 %v437, %v438
      %v440 = vsel %vm434, %v411, 0.0
      %v441 = vsel %vm434, %v419, 0.0
      %v442 = vadd.f32 %v440, %v441
      %v443 = vsel %vm434, %v427, 0.0
      %v444 = vadd.f32 %v442, %v443
      %v445 = vsub.f32 0.0, %v439
      %v446 = vsub.f32 0.0, %v444
      %v447 = vmul.f32 %v445, 0.33333334
      %v448 = vmul.f32 %v446, 0.33333334
      %v449 = vmul.f32 %v447, 1.442695
      %v450 = vpow.pop %v449
      %v451 = vmul.f32 %v448, 1.442695
      %v452 = vpow.pop %v451
      %v456 = vlaneseq
      %v457 = vshrl.u32 %v456, 7
      %v458 = vsub.s32 0, %v457
      %v459 = vrot.slane %v397, %v458
      %v460 = vlaneseq
      %v461 = vshrl.u32 %v460, 7
      %v462 = vsub.s32 1, %v461
      %v463 = vrot.slane %v397, %v462
      %v464 = vlaneseq
      %v465 = vshrl.u32 %v464, 7
      %v466 = vsub.s32 0, %v465
      %v467 = vrot.slane %v398, %v466
      %v468 = vlaneseq
      %v469 = vshrl.u32 %v468, 7
      %v470 = vsub.s32 1, %v469
      %v471 = vrot.slane %v398, %v470
      %v472 = vlaneseq
      %v473 = vshrl.u32 %v472, 7
      %v474 = vsub.s32 0, %v473
      %v475 = vrot.slane %v399, %v474
      %v476 = vlaneseq
      %v477 = vshrl.u32 %v476, 7
      %v478 = vsub.s32 1, %v477
      %v479 = vrot.slane %v399, %v478
      %v486 = vsel %vm434, %v459, 0.0
      %v487 = vsel %vm434, %v467, 0.0
      %v488 = vadd.f32 %v486, %v487
      %v489 = vsel %vm434, %v475, 0.0
      %v490 = vadd.f32 %v488, %v489
      %v491 = vsel %vm434, %v463, 0.0
      %v492 = vsel %vm434, %v471, 0.0
      %v493 = vadd.f32 %v491, %v492
      %v494 = vsel %vm434, %v479, 0.0
      %v495 = vadd.f32 %v493, %v494
      %v496 = vsub.f32 0.0, %v490
      %v497 = vsub.f32 0.0, %v495
      %v498 = vmul.f32 %v496, 0.33333334
      %v499 = vmul.f32 %v497, 0.33333334
      %v500 = vmul.f32 %v498, 1.442695
      %v501 = vpow.pop %v500
      %v502 = vmul.f32 %v499, 1.442695
      %v503 = vpow.pop %v502
      %v504 = vld [vmem:[%s1] ss:$2 sm:$0x3]
      %v506 = vlaneseq
      %v507 = vshrl.u32 %v506, 7
      %v508 = vsub.s32 0, %v507
      %v509 = vrot.slane %v504, %v508
      %v510 = vlaneseq
      %v511 = vshrl.u32 %v510, 7
      %v512 = vsub.s32 1, %v511
      %v513 = vrot.slane %v504, %v512
      %v516 = vmul.f32 %v450, %v509
      %v517 = vmul.f32 %v452, %v513
      %s518 = scalar_lea.vmem %s1, 1
      %v519 = vld [vmem:[%s518] ss:$2 sm:$0x3]
      %v521 = vlaneseq
      %v522 = vshrl.u32 %v521, 7
      %v523 = vsub.s32 0, %v522
      %v524 = vrot.slane %v519, %v523
      %v525 = vlaneseq
      %v526 = vshrl.u32 %v525, 7
      %v527 = vsub.s32 1, %v526
      %v528 = vrot.slane %v519, %v527
      %v531 = vmul.f32 %v501, %v524
      %v532 = vmul.f32 %v503, %v528
      %v533 = vadd.f32 %v320, 0.0
      %v536 = vcombine.low %v516, %v517
      %v538 = vunpack.c.l.s4 1966171168
      %v539 = vunpack.c.0.s8 %v538
      %v540 = vlaneseq
      %v541 = vshrl.u32 %v540, 7
      %v542 = vsub.s32 %v539, %v541
      %v543 = vrot.slane %v536, %v542
      %v545 = vunpack.c.l.s4 1966171168
      %v546 = vunpack.c.0.s8 %v545
      %v547 = vlaneseq
      %v548 = vshrl.u32 %v547, 7
      %v549 = vsub.s32 %v546, %v548
      %v550 = vrot.slane %v543, %v549
      %v552 = vmul.f32 %v533, %v550
      %v553 = vadd.f32 %v400, 0.0
      %v556 = vcombine.low %v531, %v532
      %v558 = vunpack.c.l.s4 1966171168
      %v559 = vunpack.c.0.s8 %v558
      %v560 = vlaneseq
      %v561 = vshrl.u32 %v560, 7
      %v562 = vsub.s32 %v559, %v561
      %v563 = vrot.slane %v556, %v562
      %v565 = vunpack.c.l.s4 1966171168
      %v566 = vunpack.c.0.s8 %v565
      %v567 = vlaneseq
      %v568 = vshrl.u32 %v567, 7
      %v569 = vsub.s32 %v566, %v568
      %v570 = vrot.slane %v563, %v569
      %v572 = vmul.f32 %v553, %v570
      %v573 = vadd.f32 %v552, 0.0
      %v574 = vlaneseq
      %vm575 = vcmp.ge.s32.totalorder %v574, 0
      %vm576 = vcmp.lt.s32.totalorder %v574, 256
      %vm577 = vmand %vm575, %vm576
      %578 = vst.msk [vmem:[%s140] ss:$2 sm:$0x3] %vm577, %v573
      %v579 = vadd.f32 %v572, 0.0
      %s580 = scalar_lea.vmem %s140, 1
      %581 = vst.msk [vmem:[%s580] ss:$2 sm:$0x3] %vm577, %v579
      %p582 = scmp.lt.s32.totalorder %s13, 1
      %s583 = scalar_select %p582, %s13, 1
      %s584 = smul.addr %s583, 2
      %s585 = smul.addr %s584, 2
      %s586 = scalar_lea.vmem %s2, %s585
      // Predicated region
      $region29: #{smoothness_loss.4} parent=27 // pred_check
        %p587 = pneg %p78
      $region30: #{smoothness_loss.4} parent=27 // pred_check_branch
        %589 = sbr.rel (%p587) target = $region32
      $region31: #{smoothness_loss.4} parent=27 // pred_region
        _
      $region32: #{smoothness_loss.4} parent=27 // pred_fallthru
        _
    $region28: #{smoothness_loss.4} parent=5 // pred_fallthru
      _
    %p590 = scmp.le.s32.totalorder 2, %s8
    // Predicated region
    $region33: #{smoothness_loss.4} parent=5 // pred_check
      %p591 = pneg %p590
    $region34: #{smoothness_loss.4} parent=5 // pred_check_branch
      %593 = sbr.rel (%p591) target = $region36
    $region35: #{smoothness_loss.4} parent=5 // pred_region
      %s594 = ssub.s32 %s8, 2
      // Predicated region
      $region37: #{smoothness_loss.4} parent=35 // pred_check
        %p595 = pneg %p84
      $region38: #{smoothness_loss.4} parent=35 // pred_check_branch
        %597 = sbr.rel (%p595) target = $region40
      $region39: #{smoothness_loss.4} parent=35 // pred_region
        %p598 = scmp.lt.s32.totalorder %s14, 1
        %s599 = scalar_select %p598, %s14, 1
        %s600 = smul.addr %s599, 2
        %s601 = smul.addr %s600, 2
        %s602 = scalar_lea.vmem %s2, %s601
      $region40: #{smoothness_loss.4} parent=35 // pred_fallthru
        _
    $region36: #{smoothness_loss.4} parent=5 // pred_fallthru
      _
  $region6: #{smoothness_loss.4} parent=0 // loop_footer
    %s12 = sadd.s32 1, %s8
  $region7: #{smoothness_loss.4} parent=0 // loop_footer_branch
    %7 = sbr.rel target = $region3
  $region8: #{smoothness_loss.4} parent=0 // loop_exit
    _

// kernel: smoothness_loss.3
$region0: #{smoothness_loss.3}
  #allocation0 [shape = 'u32[]', space=smem, size = 0x4, offset = 0x4, fixed_abs, tag = 'smem constant byte address 0x4 - core index']
  #allocation1 [shape = 'u32[144,128]{1,0:T(1,128)}', space=vmem, size = 0x12000, scoped, tag = 'internal scratch']
  %s0 = inlined_call_operand.vmem [shape: f32[2,4,1,1024], index: 0, kind: input, shape index: {}]
  %s1 = inlined_call_operand.vmem [shape: f32[2,1024], index: 1, kind: input, shape index: {}]
  %s2 = inlined_call_operand.vmem [shape: f32[2,2,1024], index: 2, kind: output, shape index: {}]
  %s3 = sld [smem:[#allocation0]]
  $region41: #{smoothness_loss.3} parent=0
    _
  %s5 = ssub.s32 1, %s3
  %s6 = scalar_select 0, %s5, %s3
  loop: start=0, step=1, limit=4
  $region2: #{smoothness_loss.3} parent=0 // loop_pre_header
    _
  $region3: #{smoothness_loss.3} parent=0 // loop_header
    %s8 = sphi 0, %s12
    %p9 = scmp.ge.s32.totalorder %s8, 4
    %s18 = sphi 0, %s20
    %s21 = sphi 0, %s18
    %s22 = sphi 0, %s21
    %s38 = sphi 0, %s22
    %s42 = sphi 0, %s42
    %s44 = sphi 0, %s42
    %s45 = sphi 0, %s44
    %s59 = sphi 0, %s45
    %s65 = sphi 0, %s67
    %s68 = sphi 0, %s65
    %s69 = sphi 0, %s68
    %s85 = sphi 0, %s69
  $region4: #{smoothness_loss.3} parent=0 // loop_header_branch
    %11 = sbr.rel (%p9) target = $region8
  $region5: #{smoothness_loss.3} parent=0 // loop_body
    %s13 = ssub.s32 %s8, 1
    %s14 = ssub.s32 %s8, 2
    %s15 = sadd.s32 %s8, 1
    %s16 = ssub.s32 %s8, %s15
    %p17 = scmp.eq.s32.totalorder %s16, 0
    %s19 = sadd.s32 %s18, 1
    %s20 = scalar_select %p17, %s18, %s19
    %p23 = pneg %p17
    %p24 = scmp.eq.s32.totalorder %s8, 1
    %p25 = por %p23, %p24
    %p26 = scmp.ne.s32.totalorder %s18, %s21
    %p27 = scmp.eq.s32.totalorder %s8, 0
    %p28 = por %p26, %p27
    %p29 = scmp.ne.s32.totalorder %s18, %s21
    %p30 = scmp.eq.s32.totalorder %s13, 1
    %p31 = por %p29, %p30
    %p32 = scmp.ne.s32.totalorder %s21, %s22
    %p33 = scmp.eq.s32.totalorder %s13, 0
    %p34 = por %p32, %p33
    %p35 = scmp.ne.s32.totalorder %s21, %s22
    %p36 = scmp.eq.s32.totalorder %s14, 1
    %p37 = por %p35, %p36
    %p39 = scmp.ne.s32.totalorder %s22, %s38
    %p40 = scmp.eq.s32.totalorder %s14, 0
    %p41 = por %p39, %p40
    %s43 = sadd.s32 %s42, 1
    %p46 = scmp.eq.s32.totalorder %s8, 1
    %p47 = scmp.ne.s32.totalorder %s42, %s44
    %p48 = scmp.eq.s32.totalorder %s8, 0
    %p49 = por %p47, %p48
    %p50 = scmp.ne.s32.totalorder %s42, %s44
    %p51 = scmp.eq.s32.totalorder %s13, 1
    %p52 = por %p50, %p51
    %p53 = scmp.ne.s32.totalorder %s44, %s45
    %p54 = scmp.eq.s32.totalorder %s13, 0
    %p55 = por %p53, %p54
    %p56 = scmp.ne.s32.totalorder %s44, %s45
    %p57 = scmp.eq.s32.totalorder %s14, 1
    %p58 = por %p56, %p57
    %p60 = scmp.ne.s32.totalorder %s45, %s59
    %p61 = scmp.eq.s32.totalorder %s14, 0
    %p62 = por %p60, %p61
    %s63 = ssub.s32 %s8, %s15
    %p64 = scmp.eq.s32.totalorder %s63, 0
    %s66 = sadd.s32 %s65, 1
    %s67 = scalar_select %p64, %s65, %s66
    %p70 = pneg %p64
    %p71 = scmp.eq.s32.totalorder %s8, 1
    %p72 = por %p70, %p71
    %p73 = scmp.ne.s32.totalorder %s65, %s68
    %p74 = scmp.eq.s32.totalorder %s8, 0
    %p75 = por %p73, %p74
    %p76 = scmp.ne.s32.totalorder %s65, %s68
    %p77 = scmp.eq.s32.totalorder %s13, 1
    %p78 = por %p76, %p77
    %p79 = scmp.ne.s32.totalorder %s68, %s69
    %p80 = scmp.eq.s32.totalorder %s13, 0
    %p81 = por %p79, %p80
    %p82 = scmp.ne.s32.totalorder %s68, %s69
    %p83 = scmp.eq.s32.totalorder %s14, 1
    %p84 = por %p82, %p83
    %p86 = scmp.ne.s32.totalorder %s69, %s85
    %p87 = scmp.eq.s32.totalorder %s14, 0
    %p88 = por %p86, %p87
    %p89 = scmp.le.s32.totalorder 1, %s8
    %p90 = scmp.lt.s32.totalorder %s8, 3
    %p91 = pnand %p89, %p90
    %p92 = pneg %p91
    // Predicated region
    $region9: #{smoothness_loss.3} parent=5 // pred_check
      _
    $region10: #{smoothness_loss.3} parent=5 // pred_check_branch
      %94 = sbr.rel (%p91) target = $region12
    $region11: #{smoothness_loss.3} parent=5 // pred_region
      %s95 = ssub.s32 %s8, 1
      // Predicated region
      $region13: #{smoothness_loss.3} parent=11 // pred_check
        %p96 = pneg %p55
      $region14: #{smoothness_loss.3} parent=11 // pred_check_branch
        %98 = sbr.rel (%p96) target = $region16
      $region15: #{smoothness_loss.3} parent=11 // pred_region
        _
      $region16: #{smoothness_loss.3} parent=11 // pred_fallthru
        _
    $region12: #{smoothness_loss.3} parent=5 // pred_fallthru
      _
    %p99 = scmp.lt.s32.totalorder %s8, 2
    // Predicated region
    $region17: #{smoothness_loss.3} parent=5 // pred_check
      %p100 = pneg %p99
    $region18: #{smoothness_loss.3} parent=5 // pred_check_branch
      %102 = sbr.rel (%p100) target = $region20
    $region19: #{smoothness_loss.3} parent=5 // pred_region
      // Predicated region
      $region21: #{smoothness_loss.3} parent=19 // pred_check
        %p103 = pneg %p28
      $region22: #{smoothness_loss.3} parent=19 // pred_check_branch
        %105 = sbr.rel (%p103) target = $region24
      $region23: #{smoothness_loss.3} parent=19 // pred_region
        %p106 = scmp.lt.s32.totalorder %s8, 1
        %s107 = scalar_select %p106, %s8, 1
        %s108 = smul.addr %s107, 32
        %s109 = scalar_lea.vmem %s0, %s108
      $region24: #{smoothness_loss.3} parent=19 // pred_fallthru
        _
    $region20: #{smoothness_loss.3} parent=5 // pred_fallthru
      _
    %p110 = scmp.le.s32.totalorder 1, %s8
    %p111 = scmp.lt.s32.totalorder %s8, 3
    %p112 = pnand %p110, %p111
    %p113 = pneg %p112
    // Predicated region
    $region25: #{smoothness_loss.3} parent=5 // pred_check
      _
    $region26: #{smoothness_loss.3} parent=5 // pred_check_branch
      %115 = sbr.rel (%p112) target = $region28
    $region27: #{smoothness_loss.3} parent=5 // pred_region
      %s116 = ssub.s32 %s8, 1
      %p117 = scmp.lt.s32.totalorder %s13, 1
      %s118 = scalar_select %p117, %s13, 1
      %s119 = smul.addr %s118, 32
      %s120 = scalar_lea.vmem %s0, %s119
      %p121 = pneg %p34
      %p122 = pneg %p31
      %p123 = pneg %p55
      %p124 = pneg %p52
      %p125 = pneg %p81
      %p126 = pneg %p78
      %p127 = scmp.lt.s32.totalorder %s13, 1
      %s128 = scalar_select %p127, %s13, 1
      %s129 = smul.addr %s128, 8
      %s130 = smul.addr %s129, 2
      %s131 = scalar_lea.vmem %s2, %s130
      %p132 = scmp.lt.s32.totalorder %s13, 1
      %s133 = scalar_select %p132, %s13, 1
      %s134 = smul.addr %s133, 32
      %s135 = scalar_lea.vmem %s0, %s134
      %p136 = scmp.lt.s32.totalorder %s13, 1
      %s137 = scalar_select %p136, %s13, 1
      %s138 = smul.addr %s137, 8
      %s139 = smul.addr %s138, 2
      %s140 = scalar_lea.vmem %s2, %s139
      %v141 = vld [vmem:[%s135] sm:$0xff]
      %v142 = vld [vmem:[%s135 + $0x8] sm:$0xff]
      %v143 = vld [vmem:[%s135 + $0x10] sm:$0xff]
      %v144 = vld [vmem:[%s135 + $0x18] sm:$0xff]
      %v149 = vlaneseq
      %v150 = vshrl.u32 %v149, 7
      %v151 = vsub.s32 0, %v150
      %v152 = vrot.slane %v141, %v151
      %v153 = vlaneseq
      %v154 = vshrl.u32 %v153, 7
      %v155 = vsub.s32 1, %v154
      %v156 = vrot.slane %v141, %v155
      %v157 = vlaneseq
      %v158 = vshrl.u32 %v157, 7
      %v159 = vsub.s32 2, %v158
      %v160 = vrot.slane %v141, %v159
      %v161 = vlaneseq
      %v162 = vshrl.u32 %v161, 7
      %v163 = vsub.s32 3, %v162
      %v164 = vrot.slane %v141, %v163
      %v165 = vlaneseq
      %v166 = vshrl.u32 %v165, 7
      %v167 = vsub.s32 4, %v166
      %v168 = vrot.slane %v141, %v167
      %v169 = vlaneseq
      %v170 = vshrl.u32 %v169, 7
      %v171 = vsub.s32 5, %v170
      %v172 = vrot.slane %v141, %v171
      %v173 = vlaneseq
      %v174 = vshrl.u32 %v173, 7
      %v175 = vsub.s32 6, %v174
      %v176 = vrot.slane %v141, %v175
      %v177 = vlaneseq
      %v178 = vshrl.u32 %v177, 7
      %v179 = vsub.s32 7, %v178
      %v180 = vrot.slane %v141, %v179
      %v181 = vlaneseq
      %v182 = vshrl.u32 %v181, 7
      %v183 = vsub.s32 0, %v182
      %v184 = vrot.slane %v142, %v183
      %v185 = vlaneseq
      %v186 = vshrl.u32 %v185, 7
      %v187 = vsub.s32 1, %v186
      %v188 = vrot.slane %v142, %v187
      %v189 = vlaneseq
      %v190 = vshrl.u32 %v189, 7
      %v191 = vsub.s32 2, %v190
      %v192 = vrot.slane %v142, %v191
      %v193 = vlaneseq
      %v194 = vshrl.u32 %v193, 7
      %v195 = vsub.s32 3, %v194
      %v196 = vrot.slane %v142, %v195
      %v197 = vlaneseq
      %v198 = vshrl.u32 %v197, 7
      %v199 = vsub.s32 4, %v198
      %v200 = vrot.slane %v142, %v199
      %v201 = vlaneseq
      %v202 = vshrl.u32 %v201, 7
      %v203 = vsub.s32 5, %v202
      %v204 = vrot.slane %v142, %v203
      %v205 = vlaneseq
      %v206 = vshrl.u32 %v205, 7
      %v207 = vsub.s32 6, %v206
      %v208 = vrot.slane %v142, %v207
      %v209 = vlaneseq
      %v210 = vshrl.u32 %v209, 7
      %v211 = vsub.s32 7, %v210
      %v212 = vrot.slane %v142, %v211
      %v213 = vlaneseq
      %v214 = vshrl.u32 %v213, 7
      %v215 = vsub.s32 0, %v214
      %v216 = vrot.slane %v143, %v215
      %v217 = vlaneseq
      %v218 = vshrl.u32 %v217, 7
      %v219 = vsub.s32 1, %v218
      %v220 = vrot.slane %v143, %v219
      %v221 = vlaneseq
      %v222 = vshrl.u32 %v221, 7
      %v223 = vsub.s32 2, %v222
      %v224 = vrot.slane %v143, %v223
      %v225 = vlaneseq
      %v226 = vshrl.u32 %v225, 7
      %v227 = vsub.s32 3, %v226
      %v228 = vrot.slane %v143, %v227
      %v229 = vlaneseq
      %v230 = vshrl.u32 %v229, 7
      %v231 = vsub.s32 4, %v230
      %v232 = vrot.slane %v143, %v231
      %v233 = vlaneseq
      %v234 = vshrl.u32 %v233, 7
      %v235 = vsub.s32 5, %v234
      %v236 = vrot.slane %v143, %v235
      %v237 = vlaneseq
      %v238 = vshrl.u32 %v237, 7
      %v239 = vsub.s32 6, %v238
      %v240 = vrot.slane %v143, %v239
      %v241 = vlaneseq
      %v242 = vshrl.u32 %v241, 7
      %v243 = vsub.s32 7, %v242
      %v244 = vrot.slane %v143, %v243
      %v245 = vlaneseq
      %v246 = vshrl.u32 %v245, 7
      %v247 = vsub.s32 0, %v246
      %v248 = vrot.slane %v144, %v247
      %v249 = vlaneseq
      %v250 = vshrl.u32 %v249, 7
      %v251 = vsub.s32 1, %v250
      %v252 = vrot.slane %v144, %v251
      %v253 = vlaneseq
      %v254 = vshrl.u32 %v253, 7
      %v255 = vsub.s32 2, %v254
      %v256 = vrot.slane %v144, %v255
      %v257 = vlaneseq
      %v258 = vshrl.u32 %v257, 7
      %v259 = vsub.s32 3, %v258
      %v260 = vrot.slane %v144, %v259
      %v261 = vlaneseq
      %v262 = vshrl.u32 %v261, 7
      %v263 = vsub.s32 4, %v262
      %v264 = vrot.slane %v144, %v263
      %v265 = vlaneseq
      %v266 = vshrl.u32 %v265, 7
      %v267 = vsub.s32 5, %v266
      %v268 = vrot.slane %v144, %v267
      %v269 = vlaneseq
      %v270 = vshrl.u32 %v269, 7
      %v271 = vsub.s32 6, %v270
      %v272 = vrot.slane %v144, %v271
      %v273 = vlaneseq
      %v274 = vshrl.u32 %v273, 7
      %v275 = vsub.s32 7, %v274
      %v276 = vrot.slane %v144, %v275
      %309 = vrot.lane.b32.xlu0 %v152, 96
      %v310 = vpop.permute.xlu0 %309
      %311 = vrot.lane.b32.xlu0 %v184, 96
      %v312 = vpop.permute.xlu0 %311
      %313 = vrot.lane.b32.xlu0 %v216, 96
      %v314 = vpop.permute.xlu0 %313
      %315 = vrot.lane.b32.xlu0 %v248, 96
      %v316 = vpop.permute.xlu0 %315
      %317 = vrot.lane.b32.xlu0 %v156, 96
      %v318 = vpop.permute.xlu0 %317
      %319 = vrot.lane.b32.xlu0 %v188, 96
      %v320 = vpop.permute.xlu0 %319
      %321 = vrot.lane.b32.xlu0 %v220, 96
      %v322 = vpop.permute.xlu0 %321
      %323 = vrot.lane.b32.xlu0 %v252, 96
      %v324 = vpop.permute.xlu0 %323
      %325 = vrot.lane.b32.xlu0 %v160, 96
      %v326 = vpop.permute.xlu0 %325
      %327 = vrot.lane.b32.xlu0 %v192, 96
      %v328 = vpop.permute.xlu0 %327
      %329 = vrot.lane.b32.xlu0 %v224, 96
      %v330 = vpop.permute.xlu0 %329
      %331 = vrot.lane.b32.xlu0 %v256, 96
      %v332 = vpop.permute.xlu0 %331
      %333 = vrot.lane.b32.xlu0 %v164, 96
      %v334 = vpop.permute.xlu0 %333
      %335 = vrot.lane.b32.xlu0 %v196, 96
      %v336 = vpop.permute.xlu0 %335
      %337 = vrot.lane.b32.xlu0 %v228, 96
      %v338 = vpop.permute.xlu0 %337
      %339 = vrot.lane.b32.xlu0 %v260, 96
      %v340 = vpop.permute.xlu0 %339
      %341 = vrot.lane.b32.xlu0 %v168, 96
      %v342 = vpop.permute.xlu0 %341
      %343 = vrot.lane.b32.xlu0 %v200, 96
      %v344 = vpop.permute.xlu0 %343
      %345 = vrot.lane.b32.xlu0 %v232, 96
      %v346 = vpop.permute.xlu0 %345
      %347 = vrot.lane.b32.xlu0 %v264, 96
      %v348 = vpop.permute.xlu0 %347
      %349 = vrot.lane.b32.xlu0 %v172, 96
      %v350 = vpop.permute.xlu0 %349
      %351 = vrot.lane.b32.xlu0 %v204, 96
      %v352 = vpop.permute.xlu0 %351
      %353 = vrot.lane.b32.xlu0 %v236, 96
      %v354 = vpop.permute.xlu0 %353
      %355 = vrot.lane.b32.xlu0 %v268, 96
      %v356 = vpop.permute.xlu0 %355
      %357 = vrot.lane.b32.xlu0 %v176, 96
      %v358 = vpop.permute.xlu0 %357
      %359 = vrot.lane.b32.xlu0 %v208, 96
      %v360 = vpop.permute.xlu0 %359
      %361 = vrot.lane.b32.xlu0 %v240, 96
      %v362 = vpop.permute.xlu0 %361
      %363 = vrot.lane.b32.xlu0 %v272, 96
      %v364 = vpop.permute.xlu0 %363
      %365 = vrot.lane.b32.xlu0 %v180, 96
      %v366 = vpop.permute.xlu0 %365
      %367 = vrot.lane.b32.xlu0 %v212, 96
      %v368 = vpop.permute.xlu0 %367
      %369 = vrot.lane.b32.xlu0 %v244, 96
      %v370 = vpop.permute.xlu0 %369
      %371 = vrot.lane.b32.xlu0 %v276, 96
      %v372 = vpop.permute.xlu0 %371
      %v373 = vlaneseq
      %v374 = vand.u32 %v373, 127
      %vm375 = vcmp.lt.s32.totalorder %v374, 96
      %v376 = vsel %vm375, %v358, %v366
      %v377 = vsel %vm375, %v360, %v368
      %v378 = vsel %vm375, %v362, %v370
      %v379 = vsel %vm375, %v364, %v372
      %v380 = vsel %vm375, %v350, %v358
      %v381 = vsel %vm375, %v352, %v360
      %v382 = vsel %vm375, %v354, %v362
      %v383 = vsel %vm375, %v356, %v364
      %v384 = vsel %vm375, %v342, %v350
      %v385 = vsel %vm375, %v344, %v352
      %v386 = vsel %vm375, %v346, %v354
      %v387 = vsel %vm375, %v348, %v356
      %v388 = vsel %vm375, %v334, %v342
      %v389 = vsel %vm375, %v336, %v344
      %v390 = vsel %vm375, %v338, %v346
      %v391 = vsel %vm375, %v340, %v348
      %v392 = vsel %vm375, %v326, %v334
      %v393 = vsel %vm375, %v328, %v336
      %v394 = vsel %vm375, %v330, %v338
      %v395 = vsel %vm375, %v332, %v340
      %v396 = vsel %vm375, %v318, %v326
      %v397 = vsel %vm375, %v320, %v328
      %v398 = vsel %vm375, %v322, %v330
      %v399 = vsel %vm375, %v324, %v332
      %v400 = vsel %vm375, %v310, %v318
      %v401 = vsel %vm375, %v312, %v320
      %v402 = vsel %vm375, %v314, %v322
      %v403 = vsel %vm375, %v316, %v324
      %v404 = vsel %vm375, %v366, %v310
      %v405 = vsel %vm375, %v368, %v312
      %v406 = vsel %vm375, %v370, %v314
      %v407 = vsel %vm375, %v372, %v316
      %408 = vrot.lane.b32.xlu0 %v152, 127
      %v409 = vpop.permute.xlu0 %408
      %410 = vrot.lane.b32.xlu0 %v184, 127
      %v411 = vpop.permute.xlu0 %410
      %412 = vrot.lane.b32.xlu0 %v216, 127
      %v413 = vpop.permute.xlu0 %412
      %414 = vrot.lane.b32.xlu0 %v248, 127
      %v415 = vpop.permute.xlu0 %414
      %416 = vrot.lane.b32.xlu0 %v156, 127
      %v417 = vpop.permute.xlu0 %416
      %418 = vrot.lane.b32.xlu0 %v188, 127
      %v419 = vpop.permute.xlu0 %418
      %420 = vrot.lane.b32.xlu0 %v220, 127
      %v421 = vpop.permute.xlu0 %420
      %422 = vrot.lane.b32.xlu0 %v252, 127
      %v423 = vpop.permute.xlu0 %422
      %424 = vrot.lane.b32.xlu0 %v160, 127
      %v425 = vpop.permute.xlu0 %424
      %426 = vrot.lane.b32.xlu0 %v192, 127
      %v427 = vpop.permute.xlu0 %426
      %428 = vrot.lane.b32.xlu0 %v224, 127
      %v429 = vpop.permute.xlu0 %428
      %430 = vrot.lane.b32.xlu0 %v256, 127
      %v431 = vpop.permute.xlu0 %430
      %432 = vrot.lane.b32.xlu0 %v164, 127
      %v433 = vpop.permute.xlu0 %432
      %434 = vrot.lane.b32.xlu0 %v196, 127
      %v435 = vpop.permute.xlu0 %434
      %436 = vrot.lane.b32.xlu0 %v228, 127
      %v437 = vpop.permute.xlu0 %436
      %438 = vrot.lane.b32.xlu0 %v260, 127
      %v439 = vpop.permute.xlu0 %438
      %440 = vrot.lane.b32.xlu0 %v168, 127
      %v441 = vpop.permute.xlu0 %440
      %442 = vrot.lane.b32.xlu0 %v200, 127
      %v443 = vpop.permute.xlu0 %442
      %444 = vrot.lane.b32.xlu0 %v232, 127
      %v445 = vpop.permute.xlu0 %444
      %446 = vrot.lane.b32.xlu0 %v264, 127
      %v447 = vpop.permute.xlu0 %446
      %448 = vrot.lane.b32.xlu0 %v172, 127
      %v449 = vpop.permute.xlu0 %448
      %450 = vrot.lane.b32.xlu0 %v204, 127
      %v451 = vpop.permute.xlu0 %450
      %452 = vrot.lane.b32.xlu0 %v236, 127
      %v453 = vpop.permute.xlu0 %452
      %454 = vrot.lane.b32.xlu0 %v268, 127
      %v455 = vpop.permute.xlu0 %454
      %456 = vrot.lane.b32.xlu0 %v176, 127
      %v457 = vpop.permute.xlu0 %456
      %458 = vrot.lane.b32.xlu0 %v208, 127
      %v459 = vpop.permute.xlu0 %458
      %460 = vrot.lane.b32.xlu0 %v240, 127
      %v461 = vpop.permute.xlu0 %460
      %462 = vrot.lane.b32.xlu0 %v272, 127
      %v463 = vpop.permute.xlu0 %462
      %464 = vrot.lane.b32.xlu0 %v180, 127
      %v465 = vpop.permute.xlu0 %464
      %466 = vrot.lane.b32.xlu0 %v212, 127
      %v467 = vpop.permute.xlu0 %466
      %468 = vrot.lane.b32.xlu0 %v244, 127
      %v469 = vpop.permute.xlu0 %468
      %470 = vrot.lane.b32.xlu0 %v276, 127
      %v471 = vpop.permute.xlu0 %470
      %vm472 = vcmp.lt.s32.totalorder %v374, 127
      %v473 = vsel %vm472, %v457, %v465
      %v474 = vsel %vm472, %v459, %v467
      %v475 = vsel %vm472, %v461, %v469
      %v476 = vsel %vm472, %v463, %v471
      %v477 = vsel %vm472, %v449, %v457
      %v478 = vsel %vm472, %v451, %v459
      %v479 = vsel %vm472, %v453, %v461
      %v480 = vsel %vm472, %v455, %v463
      %v481 = vsel %vm472, %v441, %v449
      %v482 = vsel %vm472, %v443, %v451
      %v483 = vsel %vm472, %v445, %v453
      %v484 = vsel %vm472, %v447, %v455
      %v485 = vsel %vm472, %v433, %v441
      %v486 = vsel %vm472, %v435, %v443
      %v487 = vsel %vm472, %v437, %v445
      %v488 = vsel %vm472, %v439, %v447
      %v489 = vsel %vm472, %v425, %v433
      %v490 = vsel %vm472, %v427, %v435
      %v491 = vsel %vm472, %v429, %v437
      %v492 = vsel %vm472, %v431, %v439
      %v493 = vsel %vm472, %v417, %v425
      %v494 = vsel %vm472, %v419, %v427
      %v495 = vsel %vm472, %v421, %v429
      %v496 = vsel %vm472, %v423, %v431
      %v497 = vsel %vm472, %v409, %v417
      %v498 = vsel %vm472, %v411, %v419
      %v499 = vsel %vm472, %v413, %v421
      %v500 = vsel %vm472, %v415, %v423
      %v501 = vsel %vm472, %v465, %v409
      %v502 = vsel %vm472, %v467, %v411
      %v503 = vsel %vm472, %v469, %v413
      %v504 = vsel %vm472, %v471, %v415
      %v537 = vcombine.low %v400, %v396
      %v538 = vcombine.low %v392, %v388
      %v539 = vcombine.low %v384, %v380
      %v540 = vcombine.low %v376, %v404
      %v542 = vunpack.c.l.s4 1966171168
      %v543 = vunpack.c.0.s8 %v542
      %v544 = vlaneseq
      %v545 = vshrl.u32 %v544, 7
      %v546 = vsub.s32 %v543, %v545
      %v547 = vrot.slane %v537, %v546
      %v549 = vunpack.c.l.s4 1966171168
      %v550 = vunpack.c.0.s8 %v549
      %v551 = vlaneseq
      %v552 = vshrl.u32 %v551, 7
      %v553 = vsub.s32 %v550, %v552
      %v554 = vrot.slane %v538, %v553
      %v556 = vunpack.c.l.s4 1966171168
      %v557 = vunpack.c.0.s8 %v556
      %v558 = vlaneseq
      %v559 = vshrl.u32 %v558, 7
      %v560 = vsub.s32 %v557, %v559
      %v561 = vrot.slane %v539, %v560
      %v563 = vunpack.c.l.s4 1966171168
      %v564 = vunpack.c.0.s8 %v563
      %v565 = vlaneseq
      %v566 = vshrl.u32 %v565, 7
      %v567 = vsub.s32 %v564, %v566
      %v568 = vrot.slane %v540, %v567
      %v569 = vcombine.low %v547, %v554
      %v570 = vcombine.low %v561, %v568
      %v572 = vunpack.c.l.s4 1966171168
      %v573 = vunpack.c.0.s8 %v572
      %v574 = vlaneseq
      %v575 = vshrl.u32 %v574, 7
      %v576 = vsub.s32 %v573, %v575
      %v577 = vrot.slane %v569, %v576
      %v579 = vunpack.c.l.s4 1966171168
      %v580 = vunpack.c.0.s8 %v579
      %v581 = vlaneseq
      %v582 = vshrl.u32 %v581, 7
      %v583 = vsub.s32 %v580, %v582
      %v584 = vrot.slane %v570, %v583
      %v585 = vcombine.low %v577, %v584
      %v586 = vcombine.low %v401, %v397
      %v587 = vcombine.low %v393, %v389
      %v588 = vcombine.low %v385, %v381
      %v589 = vcombine.low %v377, %v405
      %v591 = vunpack.c.l.s4 1966171168
      %v592 = vunpack.c.0.s8 %v591
      %v593 = vlaneseq
      %v594 = vshrl.u32 %v593, 7
      %v595 = vsub.s32 %v592, %v594
      %v596 = vrot.slane %v586, %v595
      %v598 = vunpack.c.l.s4 1966171168
      %v599 = vunpack.c.0.s8 %v598
      %v600 = vlaneseq
      %v601 = vshrl.u32 %v600, 7
      %v602 = vsub.s32 %v599, %v601
      %v603 = vrot.slane %v587, %v602
      %v605 = vunpack.c.l.s4 1966171168
      %v606 = vunpack.c.0.s8 %v605
      %v607 = vlaneseq
      %v608 = vshrl.u32 %v607, 7
      %v609 = vsub.s32 %v606, %v608
      %v610 = vrot.slane %v588, %v609
      %v612 = vunpack.c.l.s4 1966171168
      %v613 = vunpack.c.0.s8 %v612
      %v614 = vlaneseq
      %v615 = vshrl.u32 %v614, 7
      %v616 = vsub.s32 %v613, %v615
      %v617 = vrot.slane %v589, %v616
      %v618 = vcombine.low %v596, %v603
      %v619 = vcombine.low %v610, %v617
      %v621 = vunpack.c.l.s4 1966171168
      %v622 = vunpack.c.0.s8 %v621
      %v623 = vlaneseq
      %v624 = vshrl.u32 %v623, 7
      %v625 = vsub.s32 %v622, %v624
      %v626 = vrot.slane %v618, %v625
      %v628 = vunpack.c.l.s4 1966171168
      %v629 = vunpack.c.0.s8 %v628
      %v630 = vlaneseq
      %v631 = vshrl.u32 %v630, 7
      %v632 = vsub.s32 %v629, %v631
      %v633 = vrot.slane %v619, %v632
      %v634 = vcombine.low %v626, %v633
      %v635 = vcombine.low %v402, %v398
      %v636 = vcombine.low %v394, %v390
      %v637 = vcombine.low %v386, %v382
      %v638 = vcombine.low %v378, %v406
      %v640 = vunpack.c.l.s4 1966171168
      %v641 = vunpack.c.0.s8 %v640
      %v642 = vlaneseq
      %v643 = vshrl.u32 %v642, 7
      %v644 = vsub.s32 %v641, %v643
      %v645 = vrot.slane %v635, %v644
      %v647 = vunpack.c.l.s4 1966171168
      %v648 = vunpack.c.0.s8 %v647
      %v649 = vlaneseq
      %v650 = vshrl.u32 %v649, 7
      %v651 = vsub.s32 %v648, %v650
      %v652 = vrot.slane %v636, %v651
      %v654 = vunpack.c.l.s4 1966171168
      %v655 = vunpack.c.0.s8 %v654
      %v656 = vlaneseq
      %v657 = vshrl.u32 %v656, 7
      %v658 = vsub.s32 %v655, %v657
      %v659 = vrot.slane %v637, %v658
      %v661 = vunpack.c.l.s4 1966171168
      %v662 = vunpack.c.0.s8 %v661
      %v663 = vlaneseq
      %v664 = vshrl.u32 %v663, 7
      %v665 = vsub.s32 %v662, %v664
      %v666 = vrot.slane %v638, %v665
      %v667 = vcombine.low %v645, %v652
      %v668 = vcombine.low %v659, %v666
      %v670 = vunpack.c.l.s4 1966171168
      %v671 = vunpack.c.0.s8 %v670
      %v672 = vlaneseq
      %v673 = vshrl.u32 %v672, 7
      %v674 = vsub.s32 %v671, %v673
      %v675 = vrot.slane %v667, %v674
      %v677 = vunpack.c.l.s4 1966171168
      %v678 = vunpack.c.0.s8 %v677
      %v679 = vlaneseq
      %v680 = vshrl.u32 %v679, 7
      %v681 = vsub.s32 %v678, %v680
      %v682 = vrot.slane %v668, %v681
      %v683 = vcombine.low %v675, %v682
      %v684 = vcombine.low %v403, %v399
      %v685 = vcombine.low %v395, %v391
      %v686 = vcombine.low %v387, %v383
      %v687 = vcombine.low %v379, %v407
      %v689 = vunpack.c.l.s4 1966171168
      %v690 = vunpack.c.0.s8 %v689
      %v691 = vlaneseq
      %v692 = vshrl.u32 %v691, 7
      %v693 = vsub.s32 %v690, %v692
      %v694 = vrot.slane %v684, %v693
      %v696 = vunpack.c.l.s4 1966171168
      %v697 = vunpack.c.0.s8 %v696
      %v698 = vlaneseq
      %v699 = vshrl.u32 %v698, 7
      %v700 = vsub.s32 %v697, %v699
      %v701 = vrot.slane %v685, %v700
      %v703 = vunpack.c.l.s4 1966171168
      %v704 = vunpack.c.0.s8 %v703
      %v705 = vlaneseq
      %v706 = vshrl.u32 %v705, 7
      %v707 = vsub.s32 %v704, %v706
      %v708 = vrot.slane %v686, %v707
      %v710 = vunpack.c.l.s4 1966171168
      %v711 = vunpack.c.0.s8 %v710
      %v712 = vlaneseq
      %v713 = vshrl.u32 %v712, 7
      %v714 = vsub.s32 %v711, %v713
      %v715 = vrot.slane %v687, %v714
      %v716 = vcombine.low %v694, %v701
      %v717 = vcombine.low %v708, %v715
      %v719 = vunpack.c.l.s4 1966171168
      %v720 = vunpack.c.0.s8 %v719
      %v721 = vlaneseq
      %v722 = vshrl.u32 %v721, 7
      %v723 = vsub.s32 %v720, %v722
      %v724 = vrot.slane %v716, %v723
      %v726 = vunpack.c.l.s4 1966171168
      %v727 = vunpack.c.0.s8 %v726
      %v728 = vlaneseq
      %v729 = vshrl.u32 %v728, 7
      %v730 = vsub.s32 %v727, %v729
      %v731 = vrot.slane %v717, %v730
      %v732 = vcombine.low %v724, %v731
      %v737 = vsub.f32 %v141, %v585
      %v738 = vsub.f32 %v142, %v634
      %v739 = vsub.f32 %v143, %v683
      %v740 = vsub.f32 %v144, %v732
      %v741 = vand.u32 2147483647, %v737
      %v742 = vand.u32 2147483647, %v738
      %v743 = vand.u32 2147483647, %v739
      %v744 = vand.u32 2147483647, %v740
      %v777 = vcombine.low %v497, %v493
      %v778 = vcombine.low %v489, %v485
      %v779 = vcombine.low %v481, %v477
      %v780 = vcombine.low %v473, %v501
      %v782 = vunpack.c.l.s4 1966171168
      %v783 = vunpack.c.0.s8 %v782
      %v784 = vlaneseq
      %v785 = vshrl.u32 %v784, 7
      %v786 = vsub.s32 %v783, %v785
      %v787 = vrot.slane %v777, %v786
      %v789 = vunpack.c.l.s4 1966171168
      %v790 = vunpack.c.0.s8 %v789
      %v791 = vlaneseq
      %v792 = vshrl.u32 %v791, 7
      %v793 = vsub.s32 %v790, %v792
      %v794 = vrot.slane %v778, %v793
      %v796 = vunpack.c.l.s4 1966171168
      %v797 = vunpack.c.0.s8 %v796
      %v798 = vlaneseq
      %v799 = vshrl.u32 %v798, 7
      %v800 = vsub.s32 %v797, %v799
      %v801 = vrot.slane %v779, %v800
      %v803 = vunpack.c.l.s4 1966171168
      %v804 = vunpack.c.0.s8 %v803
      %v805 = vlaneseq
      %v806 = vshrl.u32 %v805, 7
      %v807 = vsub.s32 %v804, %v806
      %v808 = vrot.slane %v780, %v807
      %v809 = vcombine.low %v787, %v794
      %v810 = vcombine.low %v801, %v808
      %v812 = vunpack.c.l.s4 1966171168
      %v813 = vunpack.c.0.s8 %v812
      %v814 = vlaneseq
      %v815 = vshrl.u32 %v814, 7
      %v816 = vsub.s32 %v813, %v815
      %v817 = vrot.slane %v809, %v816
      %v819 = vunpack.c.l.s4 1966171168
      %v820 = vunpack.c.0.s8 %v819
      %v821 = vlaneseq
      %v822 = vshrl.u32 %v821, 7
      %v823 = vsub.s32 %v820, %v822
      %v824 = vrot.slane %v810, %v823
      %v825 = vcombine.low %v817, %v824
      %v826 = vcombine.low %v498, %v494
      %v827 = vcombine.low %v490, %v486
      %v828 = vcombine.low %v482, %v478
      %v829 = vcombine.low %v474, %v502
      %v831 = vunpack.c.l.s4 1966171168
      %v832 = vunpack.c.0.s8 %v831
      %v833 = vlaneseq
      %v834 = vshrl.u32 %v833, 7
      %v835 = vsub.s32 %v832, %v834
      %v836 = vrot.slane %v826, %v835
      %v838 = vunpack.c.l.s4 1966171168
      %v839 = vunpack.c.0.s8 %v838
      %v840 = vlaneseq
      %v841 = vshrl.u32 %v840, 7
      %v842 = vsub.s32 %v839, %v841
      %v843 = vrot.slane %v827, %v842
      %v845 = vunpack.c.l.s4 1966171168
      %v846 = vunpack.c.0.s8 %v845
      %v847 = vlaneseq
      %v848 = vshrl.u32 %v847, 7
      %v849 = vsub.s32 %v846, %v848
      %v850 = vrot.slane %v828, %v849
      %v852 = vunpack.c.l.s4 1966171168
      %v853 = vunpack.c.0.s8 %v852
      %v854 = vlaneseq
      %v855 = vshrl.u32 %v854, 7
      %v856 = vsub.s32 %v853, %v855
      %v857 = vrot.slane %v829, %v856
      %v858 = vcombine.low %v836, %v843
      %v859 = vcombine.low %v850, %v857
      %v861 = vunpack.c.l.s4 1966171168
      %v862 = vunpack.c.0.s8 %v861
      %v863 = vlaneseq
      %v864 = vshrl.u32 %v863, 7
      %v865 = vsub.s32 %v862, %v864
      %v866 = vrot.slane %v858, %v865
      %v868 = vunpack.c.l.s4 1966171168
      %v869 = vunpack.c.0.s8 %v868
      %v870 = vlaneseq
      %v871 = vshrl.u32 %v870, 7
      %v872 = vsub.s32 %v869, %v871
      %v873 = vrot.slane %v859, %v872
      %v874 = vcombine.low %v866, %v873
      %v875 = vcombine.low %v499, %v495
      %v876 = vcombine.low %v491, %v487
      %v877 = vcombine.low %v483, %v479
      %v878 = vcombine.low %v475, %v503
      %v880 = vunpack.c.l.s4 1966171168
      %v881 = vunpack.c.0.s8 %v880
      %v882 = vlaneseq
      %v883 = vshrl.u32 %v882, 7
      %v884 = vsub.s32 %v881, %v883
      %v885 = vrot.slane %v875, %v884
      %v887 = vunpack.c.l.s4 1966171168
      %v888 = vunpack.c.0.s8 %v887
      %v889 = vlaneseq
      %v890 = vshrl.u32 %v889, 7
      %v891 = vsub.s32 %v888, %v890
      %v892 = vrot.slane %v876, %v891
      %v894 = vunpack.c.l.s4 1966171168
      %v895 = vunpack.c.0.s8 %v894
      %v896 = vlaneseq
      %v897 = vshrl.u32 %v896, 7
      %v898 = vsub.s32 %v895, %v897
      %v899 = vrot.slane %v877, %v898
      %v901 = vunpack.c.l.s4 1966171168
      %v902 = vunpack.c.0.s8 %v901
      %v903 = vlaneseq
      %v904 = vshrl.u32 %v903, 7
      %v905 = vsub.s32 %v902, %v904
      %v906 = vrot.slane %v878, %v905
      %v907 = vcombine.low %v885, %v892
      %v908 = vcombine.low %v899, %v906
      %v910 = vunpack.c.l.s4 1966171168
      %v911 = vunpack.c.0.s8 %v910
      %v912 = vlaneseq
      %v913 = vshrl.u32 %v912, 7
      %v914 = vsub.s32 %v911, %v913
      %v915 = vrot.slane %v907, %v914
      %v917 = vunpack.c.l.s4 1966171168
      %v918 = vunpack.c.0.s8 %v917
      %v919 = vlaneseq
      %v920 = vshrl.u32 %v919, 7
      %v921 = vsub.s32 %v918, %v920
      %v922 = vrot.slane %v908, %v921
      %v923 = vcombine.low %v915, %v922
      %v924 = vcombine.low %v500, %v496
      %v925 = vcombine.low %v492, %v488
      %v926 = vcombine.low %v484, %v480
      %v927 = vcombine.low %v476, %v504
      %v929 = vunpack.c.l.s4 1966171168
      %v930 = vunpack.c.0.s8 %v929
      %v931 = vlaneseq
      %v932 = vshrl.u32 %v931, 7
      %v933 = vsub.s32 %v930, %v932
      %v934 = vrot.slane %v924, %v933
      %v936 = vunpack.c.l.s4 1966171168
      %v937 = vunpack.c.0.s8 %v936
      %v938 = vlaneseq
      %v939 = vshrl.u32 %v938, 7
      %v940 = vsub.s32 %v937, %v939
      %v941 = vrot.slane %v925, %v940
      %v943 = vunpack.c.l.s4 1966171168
      %v944 = vunpack.c.0.s8 %v943
      %v945 = vlaneseq
      %v946 = vshrl.u32 %v945, 7
      %v947 = vsub.s32 %v944, %v946
      %v948 = vrot.slane %v926, %v947
      %v950 = vunpack.c.l.s4 1966171168
      %v951 = vunpack.c.0.s8 %v950
      %v952 = vlaneseq
      %v953 = vshrl.u32 %v952, 7
      %v954 = vsub.s32 %v951, %v953
      %v955 = vrot.slane %v927, %v954
      %v956 = vcombine.low %v934, %v941
      %v957 = vcombine.low %v948, %v955
      %v959 = vunpack.c.l.s4 1966171168
      %v960 = vunpack.c.0.s8 %v959
      %v961 = vlaneseq
      %v962 = vshrl.u32 %v961, 7
      %v963 = vsub.s32 %v960, %v962
      %v964 = vrot.slane %v956, %v963
      %v966 = vunpack.c.l.s4 1966171168
      %v967 = vunpack.c.0.s8 %v966
      %v968 = vlaneseq
      %v969 = vshrl.u32 %v968, 7
      %v970 = vsub.s32 %v967, %v969
      %v971 = vrot.slane %v957, %v970
      %v972 = vcombine.low %v964, %v971
      %v977 = vsub.f32 %v141, %v825
      %v978 = vsub.f32 %v142, %v874
      %v979 = vsub.f32 %v143, %v923
      %v980 = vsub.f32 %v144, %v972
      %v981 = vand.u32 2147483647, %v977
      %v982 = vand.u32 2147483647, %v978
      %v983 = vand.u32 2147483647, %v979
      %v984 = vand.u32 2147483647, %v980
      %v988 = vlaneseq
      %v989 = vshrl.u32 %v988, 7
      %v990 = vsub.s32 0, %v989
      %v991 = vrot.slane %v741, %v990
      %v992 = vlaneseq
      %v993 = vshrl.u32 %v992, 7
      %v994 = vsub.s32 1, %v993
      %v995 = vrot.slane %v741, %v994
      %v996 = vlaneseq
      %v997 = vshrl.u32 %v996, 7
      %v998 = vsub.s32 2, %v997
      %v999 = vrot.slane %v741, %v998
      %v1000 = vlaneseq
      %v1001 = vshrl.u32 %v1000, 7
      %v1002 = vsub.s32 3, %v1001
      %v1003 = vrot.slane %v741, %v1002
      %v1004 = vlaneseq
      %v1005 = vshrl.u32 %v1004, 7
      %v1006 = vsub.s32 4, %v1005
      %v1007 = vrot.slane %v741, %v1006
      %v1008 = vlaneseq
      %v1009 = vshrl.u32 %v1008, 7
      %v1010 = vsub.s32 5, %v1009
      %v1011 = vrot.slane %v741, %v1010
      %v1012 = vlaneseq
      %v1013 = vshrl.u32 %v1012, 7
      %v1014 = vsub.s32 6, %v1013
      %v1015 = vrot.slane %v741, %v1014
      %v1016 = vlaneseq
      %v1017 = vshrl.u32 %v1016, 7
      %v1018 = vsub.s32 7, %v1017
      %v1019 = vrot.slane %v741, %v1018
      %v1020 = vlaneseq
      %v1021 = vshrl.u32 %v1020, 7
      %v1022 = vsub.s32 0, %v1021
      %v1023 = vrot.slane %v742, %v1022
      %v1024 = vlaneseq
      %v1025 = vshrl.u32 %v1024, 7
      %v1026 = vsub.s32 1, %v1025
      %v1027 = vrot.slane %v742, %v1026
      %v1028 = vlaneseq
      %v1029 = vshrl.u32 %v1028, 7
      %v1030 = vsub.s32 2, %v1029
      %v1031 = vrot.slane %v742, %v1030
      %v1032 = vlaneseq
      %v1033 = vshrl.u32 %v1032, 7
      %v1034 = vsub.s32 3, %v1033
      %v1035 = vrot.slane %v742, %v1034
      %v1036 = vlaneseq
      %v1037 = vshrl.u32 %v1036, 7
      %v1038 = vsub.s32 4, %v1037
      %v1039 = vrot.slane %v742, %v1038
      %v1040 = vlaneseq
      %v1041 = vshrl.u32 %v1040, 7
      %v1042 = vsub.s32 5, %v1041
      %v1043 = vrot.slane %v742, %v1042
      %v1044 = vlaneseq
      %v1045 = vshrl.u32 %v1044, 7
      %v1046 = vsub.s32 6, %v1045
      %v1047 = vrot.slane %v742, %v1046
      %v1048 = vlaneseq
      %v1049 = vshrl.u32 %v1048, 7
      %v1050 = vsub.s32 7, %v1049
      %v1051 = vrot.slane %v742, %v1050
      %v1052 = vlaneseq
      %v1053 = vshrl.u32 %v1052, 7
      %v1054 = vsub.s32 0, %v1053
      %v1055 = vrot.slane %v743, %v1054
      %v1056 = vlaneseq
      %v1057 = vshrl.u32 %v1056, 7
      %v1058 = vsub.s32 1, %v1057
      %v1059 = vrot.slane %v743, %v1058
      %v1060 = vlaneseq
      %v1061 = vshrl.u32 %v1060, 7
      %v1062 = vsub.s32 2, %v1061
      %v1063 = vrot.slane %v743, %v1062
      %v1064 = vlaneseq
      %v1065 = vshrl.u32 %v1064, 7
      %v1066 = vsub.s32 3, %v1065
      %v1067 = vrot.slane %v743, %v1066
      %v1068 = vlaneseq
      %v1069 = vshrl.u32 %v1068, 7
      %v1070 = vsub.s32 4, %v1069
      %v1071 = vrot.slane %v743, %v1070
      %v1072 = vlaneseq
      %v1073 = vshrl.u32 %v1072, 7
      %v1074 = vsub.s32 5, %v1073
      %v1075 = vrot.slane %v743, %v1074
      %v1076 = vlaneseq
      %v1077 = vshrl.u32 %v1076, 7
      %v1078 = vsub.s32 6, %v1077
      %v1079 = vrot.slane %v743, %v1078
      %v1080 = vlaneseq
      %v1081 = vshrl.u32 %v1080, 7
      %v1082 = vsub.s32 7, %v1081
      %v1083 = vrot.slane %v743, %v1082
      %vm1108 = vcmask 1040384
      %v1109 = vsel %vm1108, %v991, 0.0
      %v1110 = vsel %vm1108, %v1023, 0.0
      %v1111 = vadd.f32 %v1109, %v1110
      %v1112 = vsel %vm1108, %v1055, 0.0
      %v1113 = vadd.f32 %v1111, %v1112
      %v1114 = vsel %vm1108, %v995, 0.0
      %v1115 = vsel %vm1108, %v1027, 0.0
      %v1116 = vadd.f32 %v1114, %v1115
      %v1117 = vsel %vm1108, %v1059, 0.0
      %v1118 = vadd.f32 %v1116, %v1117
      %v1119 = vsel %vm1108, %v999, 0.0
      %v1120 = vsel %vm1108, %v1031, 0.0
      %v1121 = vadd.f32 %v1119, %v1120
      %v1122 = vsel %vm1108, %v1063, 0.0
      %v1123 = vadd.f32 %v1121, %v1122
      %v1124 = vsel %vm1108, %v1003, 0.0
      %v1125 = vsel %vm1108, %v1035, 0.0
      %v1126 = vadd.f32 %v1124, %v1125
      %v1127 = vsel %vm1108, %v1067, 0.0
      %v1128 = vadd.f32 %v1126, %v1127
      %v1129 = vsel %vm1108, %v1007, 0.0
      %v1130 = vsel %vm1108, %v1039, 0.0
      %v1131 = vadd.f32 %v1129, %v1130
      %v1132 = vsel %vm1108, %v1071, 0.0
      %v1133 = vadd.f32 %v1131, %v1132
      %v1134 = vsel %vm1108, %v1011, 0.0
      %v1135 = vsel %vm1108, %v1043, 0.0
      %v1136 = vadd.f32 %v1134, %v1135
      %v1137 = vsel %vm1108, %v1075, 0.0
      %v1138 = vadd.f32 %v1136, %v1137
      %v1139 = vsel %vm1108, %v1015, 0.0
      %v1140 = vsel %vm1108, %v1047, 0.0
      %v1141 = vadd.f32 %v1139, %v1140
      %v1142 = vsel %vm1108, %v1079, 0.0
      %v1143 = vadd.f32 %v1141, %v1142
      %v1144 = vsel %vm1108, %v1019, 0.0
      %v1145 = vsel %vm1108, %v1051, 0.0
      %v1146 = vadd.f32 %v1144, %v1145
      %v1147 = vsel %vm1108, %v1083, 0.0
      %v1148 = vadd.f32 %v1146, %v1147
      %v1149 = vsub.f32 0.0, %v1113
      %v1150 = vsub.f32 0.0, %v1118
      %v1151 = vsub.f32 0.0, %v1123
      %v1152 = vsub.f32 0.0, %v1128
      %v1153 = vsub.f32 0.0, %v1133
      %v1154 = vsub.f32 0.0, %v1138
      %v1155 = vsub.f32 0.0, %v1143
      %v1156 = vsub.f32 0.0, %v1148
      %v1157 = vmul.f32 %v1149, 0.33333334
      %v1158 = vmul.f32 %v1150, 0.33333334
      %v1159 = vmul.f32 %v1151, 0.33333334
      %v1160 = vmul.f32 %v1152, 0.33333334
      %v1161 = vmul.f32 %v1153, 0.33333334
      %v1162 = vmul.f32 %v1154, 0.33333334
      %v1163 = vmul.f32 %v1155, 0.33333334
      %v1164 = vmul.f32 %v1156, 0.33333334
      %v1165 = vmul.f32 %v1157, 1.442695
      %v1166 = vpow.pop %v1165
      %v1167 = vmul.f32 %v1158, 1.442695
      %v1168 = vpow.pop %v1167
      %v1169 = vmul.f32 %v1159, 1.442695
      %v1170 = vpow.pop %v1169
      %v1171 = vmul.f32 %v1160, 1.442695
      %v1172 = vpow.pop %v1171
      %v1173 = vmul.f32 %v1161, 1.442695
      %v1174 = vpow.pop %v1173
      %v1175 = vmul.f32 %v1162, 1.442695
      %v1176 = vpow.pop %v1175
      %v1177 = vmul.f32 %v1163, 1.442695
      %v1178 = vpow.pop %v1177
      %v1179 = vmul.f32 %v1164, 1.442695
      %v1180 = vpow.pop %v1179
      %v1184 = vlaneseq
      %v1185 = vshrl.u32 %v1184, 7
      %v1186 = vsub.s32 0, %v1185
      %v1187 = vrot.slane %v981, %v1186
      %v1188 = vlaneseq
      %v1189 = vshrl.u32 %v1188, 7
      %v1190 = vsub.s32 1, %v1189
      %v1191 = vrot.slane %v981, %v1190
      %v1192 = vlaneseq
      %v1193 = vshrl.u32 %v1192, 7
      %v1194 = vsub.s32 2, %v1193
      %v1195 = vrot.slane %v981, %v1194
      %v1196 = vlaneseq
      %v1197 = vshrl.u32 %v1196, 7
      %v1198 = vsub.s32 3, %v1197
      %v1199 = vrot.slane %v981, %v1198
      %v1200 = vlaneseq
      %v1201 = vshrl.u32 %v1200, 7
      %v1202 = vsub.s32 4, %v1201
      %v1203 = vrot.slane %v981, %v1202
      %v1204 = vlaneseq
      %v1205 = vshrl.u32 %v1204, 7
      %v1206 = vsub.s32 5, %v1205
      %v1207 = vrot.slane %v981, %v1206
      %v1208 = vlaneseq
      %v1209 = vshrl.u32 %v1208, 7
      %v1210 = vsub.s32 6, %v1209
      %v1211 = vrot.slane %v981, %v1210
      %v1212 = vlaneseq
      %v1213 = vshrl.u32 %v1212, 7
      %v1214 = vsub.s32 7, %v1213
      %v1215 = vrot.slane %v981, %v1214
      %v1216 = vlaneseq
      %v1217 = vshrl.u32 %v1216, 7
      %v1218 = vsub.s32 0, %v1217
      %v1219 = vrot.slane %v982, %v1218
      %v1220 = vlaneseq
      %v1221 = vshrl.u32 %v1220, 7
      %v1222 = vsub.s32 1, %v1221
      %v1223 = vrot.slane %v982, %v1222
      %v1224 = vlaneseq
      %v1225 = vshrl.u32 %v1224, 7
      %v1226 = vsub.s32 2, %v1225
      %v1227 = vrot.slane %v982, %v1226
      %v1228 = vlaneseq
      %v1229 = vshrl.u32 %v1228, 7
      %v1230 = vsub.s32 3, %v1229
      %v1231 = vrot.slane %v982, %v1230
      %v1232 = vlaneseq
      %v1233 = vshrl.u32 %v1232, 7
      %v1234 = vsub.s32 4, %v1233
      %v1235 = vrot.slane %v982, %v1234
      %v1236 = vlaneseq
      %v1237 = vshrl.u32 %v1236, 7
      %v1238 = vsub.s32 5, %v1237
      %v1239 = vrot.slane %v982, %v1238
      %v1240 = vlaneseq
      %v1241 = vshrl.u32 %v1240, 7
      %v1242 = vsub.s32 6, %v1241
      %v1243 = vrot.slane %v982, %v1242
      %v1244 = vlaneseq
      %v1245 = vshrl.u32 %v1244, 7
      %v1246 = vsub.s32 7, %v1245
      %v1247 = vrot.slane %v982, %v1246
      %v1248 = vlaneseq
      %v1249 = vshrl.u32 %v1248, 7
      %v1250 = vsub.s32 0, %v1249
      %v1251 = vrot.slane %v983, %v1250
      %v1252 = vlaneseq
      %v1253 = vshrl.u32 %v1252, 7
      %v1254 = vsub.s32 1, %v1253
      %v1255 = vrot.slane %v983, %v1254
      %v1256 = vlaneseq
      %v1257 = vshrl.u32 %v1256, 7
      %v1258 = vsub.s32 2, %v1257
      %v1259 = vrot.slane %v983, %v1258
      %v1260 = vlaneseq
      %v1261 = vshrl.u32 %v1260, 7
      %v1262 = vsub.s32 3, %v1261
      %v1263 = vrot.slane %v983, %v1262
      %v1264 = vlaneseq
      %v1265 = vshrl.u32 %v1264, 7
      %v1266 = vsub.s32 4, %v1265
      %v1267 = vrot.slane %v983, %v1266
      %v1268 = vlaneseq
      %v1269 = vshrl.u32 %v1268, 7
      %v1270 = vsub.s32 5, %v1269
      %v1271 = vrot.slane %v983, %v1270
      %v1272 = vlaneseq
      %v1273 = vshrl.u32 %v1272, 7
      %v1274 = vsub.s32 6, %v1273
      %v1275 = vrot.slane %v983, %v1274
      %v1276 = vlaneseq
      %v1277 = vshrl.u32 %v1276, 7
      %v1278 = vsub.s32 7, %v1277
      %v1279 = vrot.slane %v983, %v1278
      %v1304 = vsel %vm1108, %v1187, 0.0
      %v1305 = vsel %vm1108, %v1219, 0.0
      %v1306 = vadd.f32 %v1304, %v1305
      %v1307 = vsel %vm1108, %v1251, 0.0
      %v1308 = vadd.f32 %v1306, %v1307
      %v1309 = vsel %vm1108, %v1191, 0.0
      %v1310 = vsel %vm1108, %v1223, 0.0
      %v1311 = vadd.f32 %v1309, %v1310
      %v1312 = vsel %vm1108, %v1255, 0.0
      %v1313 = vadd.f32 %v1311, %v1312
      %v1314 = vsel %vm1108, %v1195, 0.0
      %v1315 = vsel %vm1108, %v1227, 0.0
      %v1316 = vadd.f32 %v1314, %v1315
      %v1317 = vsel %vm1108, %v1259, 0.0
      %v1318 = vadd.f32 %v1316, %v1317
      %v1319 = vsel %vm1108, %v1199, 0.0
      %v1320 = vsel %vm1108, %v1231, 0.0
      %v1321 = vadd.f32 %v1319, %v1320
      %v1322 = vsel %vm1108, %v1263, 0.0
      %v1323 = vadd.f32 %v1321, %v1322
      %v1324 = vsel %vm1108, %v1203, 0.0
      %v1325 = vsel %vm1108, %v1235, 0.0
      %v1326 = vadd.f32 %v1324, %v1325
      %v1327 = vsel %vm1108, %v1267, 0.0
      %v1328 = vadd.f32 %v1326, %v1327
      %v1329 = vsel %vm1108, %v1207, 0.0
      %v1330 = vsel %vm1108, %v1239, 0.0
      %v1331 = vadd.f32 %v1329, %v1330
      %v1332 = vsel %vm1108, %v1271, 0.0
      %v1333 = vadd.f32 %v1331, %v1332
      %v1334 = vsel %vm1108, %v1211, 0.0
      %v1335 = vsel %vm1108, %v1243, 0.0
      %v1336 = vadd.f32 %v1334, %v1335
      %v1337 = vsel %vm1108, %v1275, 0.0
      %v1338 = vadd.f32 %v1336, %v1337
      %v1339 = vsel %vm1108, %v1215, 0.0
      %v1340 = vsel %vm1108, %v1247, 0.0
      %v1341 = vadd.f32 %v1339, %v1340
      %v1342 = vsel %vm1108, %v1279, 0.0
      %v1343 = vadd.f32 %v1341, %v1342
      %v1344 = vsub.f32 0.0, %v1308
      %v1345 = vsub.f32 0.0, %v1313
      %v1346 = vsub.f32 0.0, %v1318
      %v1347 = vsub.f32 0.0, %v1323
      %v1348 = vsub.f32 0.0, %v1328
      %v1349 = vsub.f32 0.0, %v1333
      %v1350 = vsub.f32 0.0, %v1338
      %v1351 = vsub.f32 0.0, %v1343
      %v1352 = vmul.f32 %v1344, 0.33333334
      %v1353 = vmul.f32 %v1345, 0.33333334
      %v1354 = vmul.f32 %v1346, 0.33333334
      %v1355 = vmul.f32 %v1347, 0.33333334
      %v1356 = vmul.f32 %v1348, 0.33333334
      %v1357 = vmul.f32 %v1349, 0.33333334
      %v1358 = vmul.f32 %v1350, 0.33333334
      %v1359 = vmul.f32 %v1351, 0.33333334
      %v1360 = vmul.f32 %v1352, 1.442695
      %v1361 = vpow.pop %v1360
      %v1362 = vmul.f32 %v1353, 1.442695
      %v1363 = vpow.pop %v1362
      %v1364 = vmul.f32 %v1354, 1.442695
      %v1365 = vpow.pop %v1364
      %v1366 = vmul.f32 %v1355, 1.442695
      %v1367 = vpow.pop %v1366
      %v1368 = vmul.f32 %v1356, 1.442695
      %v1369 = vpow.pop %v1368
      %v1370 = vmul.f32 %v1357, 1.442695
      %v1371 = vpow.pop %v1370
      %v1372 = vmul.f32 %v1358, 1.442695
      %v1373 = vpow.pop %v1372
      %v1374 = vmul.f32 %v1359, 1.442695
      %v1375 = vpow.pop %v1374
      %v1376 = vld [vmem:[%s1] ss:$2 sm:$0xff]
      %v1378 = vlaneseq
      %v1379 = vshrl.u32 %v1378, 7
      %v1380 = vsub.s32 0, %v1379
      %v1381 = vrot.slane %v1376, %v1380
      %v1382 = vlaneseq
      %v1383 = vshrl.u32 %v1382, 7
      %v1384 = vsub.s32 1, %v1383
      %v1385 = vrot.slane %v1376, %v1384
      %v1386 = vlaneseq
      %v1387 = vshrl.u32 %v1386, 7
      %v1388 = vsub.s32 2, %v1387
      %v1389 = vrot.slane %v1376, %v1388
      %v1390 = vlaneseq
      %v1391 = vshrl.u32 %v1390, 7
      %v1392 = vsub.s32 3, %v1391
      %v1393 = vrot.slane %v1376, %v1392
      %v1394 = vlaneseq
      %v1395 = vshrl.u32 %v1394, 7
      %v1396 = vsub.s32 4, %v1395
      %v1397 = vrot.slane %v1376, %v1396
      %v1398 = vlaneseq
      %v1399 = vshrl.u32 %v1398, 7
      %v1400 = vsub.s32 5, %v1399
      %v1401 = vrot.slane %v1376, %v1400
      %v1402 = vlaneseq
      %v1403 = vshrl.u32 %v1402, 7
      %v1404 = vsub.s32 6, %v1403
      %v1405 = vrot.slane %v1376, %v1404
      %v1406 = vlaneseq
      %v1407 = vshrl.u32 %v1406, 7
      %v1408 = vsub.s32 7, %v1407
      %v1409 = vrot.slane %v1376, %v1408
      %v1418 = vmul.f32 %v1166, %v1381
      %v1419 = vmul.f32 %v1168, %v1385
      %v1420 = vmul.f32 %v1170, %v1389
      %v1421 = vmul.f32 %v1172, %v1393
      %v1422 = vmul.f32 %v1174, %v1397
      %v1423 = vmul.f32 %v1176, %v1401
      %v1424 = vmul.f32 %v1178, %v1405
      %v1425 = vmul.f32 %v1180, %v1409
      %s1426 = scalar_lea.vmem %s1, 1
      %v1427 = vld [vmem:[%s1426] ss:$2 sm:$0xff]
      %v1429 = vlaneseq
      %v1430 = vshrl.u32 %v1429, 7
      %v1431 = vsub.s32 0, %v1430
      %v1432 = vrot.slane %v1427, %v1431
      %v1433 = vlaneseq
      %v1434 = vshrl.u32 %v1433, 7
      %v1435 = vsub.s32 1, %v1434
      %v1436 = vrot.slane %v1427, %v1435
      %v1437 = vlaneseq
      %v1438 = vshrl.u32 %v1437, 7
      %v1439 = vsub.s32 2, %v1438
      %v1440 = vrot.slane %v1427, %v1439
      %v1441 = vlaneseq
      %v1442 = vshrl.u32 %v1441, 7
      %v1443 = vsub.s32 3, %v1442
      %v1444 = vrot.slane %v1427, %v1443
      %v1445 = vlaneseq
      %v1446 = vshrl.u32 %v1445, 7
      %v1447 = vsub.s32 4, %v1446
      %v1448 = vrot.slane %v1427, %v1447
      %v1449 = vlaneseq
      %v1450 = vshrl.u32 %v1449, 7
      %v1451 = vsub.s32 5, %v1450
      %v1452 = vrot.slane %v1427, %v1451
      %v1453 = vlaneseq
      %v1454 = vshrl.u32 %v1453, 7
      %v1455 = vsub.s32 6, %v1454
      %v1456 = vrot.slane %v1427, %v1455
      %v1457 = vlaneseq
      %v1458 = vshrl.u32 %v1457, 7
      %v1459 = vsub.s32 7, %v1458
      %v1460 = vrot.slane %v1427, %v1459
      %v1469 = vmul.f32 %v1361, %v1432
      %v1470 = vmul.f32 %v1363, %v1436
      %v1471 = vmul.f32 %v1365, %v1440
      %v1472 = vmul.f32 %v1367, %v1444
      %v1473 = vmul.f32 %v1369, %v1448
      %v1474 = vmul.f32 %v1371, %v1452
      %v1475 = vmul.f32 %v1373, %v1456
      %v1476 = vmul.f32 %v1375, %v1460
      %v1477 = vadd.f32 %v744, 0.0
      %v1486 = vcombine.low %v1418, %v1419
      %v1487 = vcombine.low %v1420, %v1421
      %v1488 = vcombine.low %v1422, %v1423
      %v1489 = vcombine.low %v1424, %v1425
      %v1491 = vunpack.c.l.s4 1966171168
      %v1492 = vunpack.c.0.s8 %v1491
      %v1493 = vlaneseq
      %v1494 = vshrl.u32 %v1493, 7
      %v1495 = vsub.s32 %v1492, %v1494
      %v1496 = vrot.slane %v1486, %v1495
      %v1498 = vunpack.c.l.s4 1966171168
      %v1499 = vunpack.c.0.s8 %v1498
      %v1500 = vlaneseq
      %v1501 = vshrl.u32 %v1500, 7
      %v1502 = vsub.s32 %v1499, %v1501
      %v1503 = vrot.slane %v1487, %v1502
      %v1505 = vunpack.c.l.s4 1966171168
      %v1506 = vunpack.c.0.s8 %v1505
      %v1507 = vlaneseq
      %v1508 = vshrl.u32 %v1507, 7
      %v1509 = vsub.s32 %v1506, %v1508
      %v1510 = vrot.slane %v1488, %v1509
      %v1512 = vunpack.c.l.s4 1966171168
      %v1513 = vunpack.c.0.s8 %v1512
      %v1514 = vlaneseq
      %v1515 = vshrl.u32 %v1514, 7
      %v1516 = vsub.s32 %v1513, %v1515
      %v1517 = vrot.slane %v1489, %v1516
      %v1518 = vcombine.low %v1496, %v1503
      %v1519 = vcombine.low %v1510, %v1517
      %v1521 = vunpack.c.l.s4 1966171168
      %v1522 = vunpack.c.0.s8 %v1521
      %v1523 = vlaneseq
      %v1524 = vshrl.u32 %v1523, 7
      %v1525 = vsub.s32 %v1522, %v1524
      %v1526 = vrot.slane %v1518, %v1525
      %v1528 = vunpack.c.l.s4 1966171168
      %v1529 = vunpack.c.0.s8 %v1528
      %v1530 = vlaneseq
      %v1531 = vshrl.u32 %v1530, 7
      %v1532 = vsub.s32 %v1529, %v1531
      %v1533 = vrot.slane %v1519, %v1532
      %v1534 = vcombine.low %v1526, %v1533
      %v1536 = vmul.f32 %v1477, %v1534
      %v1537 = vadd.f32 %v984, 0.0
      %v1546 = vcombine.low %v1469, %v1470
      %v1547 = vcombine.low %v1471, %v1472
      %v1548 = vcombine.low %v1473, %v1474
      %v1549 = vcombine.low %v1475, %v1476
      %v1551 = vunpack.c.l.s4 1966171168
      %v1552 = vunpack.c.0.s8 %v1551
      %v1553 = vlaneseq
      %v1554 = vshrl.u32 %v1553, 7
      %v1555 = vsub.s32 %v1552, %v1554
      %v1556 = vrot.slane %v1546, %v1555
      %v1558 = vunpack.c.l.s4 1966171168
      %v1559 = vunpack.c.0.s8 %v1558
      %v1560 = vlaneseq
      %v1561 = vshrl.u32 %v1560, 7
      %v1562 = vsub.s32 %v1559, %v1561
      %v1563 = vrot.slane %v1547, %v1562
      %v1565 = vunpack.c.l.s4 1966171168
      %v1566 = vunpack.c.0.s8 %v1565
      %v1567 = vlaneseq
      %v1568 = vshrl.u32 %v1567, 7
      %v1569 = vsub.s32 %v1566, %v1568
      %v1570 = vrot.slane %v1548, %v1569
      %v1572 = vunpack.c.l.s4 1966171168
      %v1573 = vunpack.c.0.s8 %v1572
      %v1574 = vlaneseq
      %v1575 = vshrl.u32 %v1574, 7
      %v1576 = vsub.s32 %v1573, %v1575
      %v1577 = vrot.slane %v1549, %v1576
      %v1578 = vcombine.low %v1556, %v1563
      %v1579 = vcombine.low %v1570, %v1577
      %v1581 = vunpack.c.l.s4 1966171168
      %v1582 = vunpack.c.0.s8 %v1581
      %v1583 = vlaneseq
      %v1584 = vshrl.u32 %v1583, 7
      %v1585 = vsub.s32 %v1582, %v1584
      %v1586 = vrot.slane %v1578, %v1585
      %v1588 = vunpack.c.l.s4 1966171168
      %v1589 = vunpack.c.0.s8 %v1588
      %v1590 = vlaneseq
      %v1591 = vshrl.u32 %v1590, 7
      %v1592 = vsub.s32 %v1589, %v1591
      %v1593 = vrot.slane %v1579, %v1592
      %v1594 = vcombine.low %v1586, %v1593
      %v1596 = vmul.f32 %v1537, %v1594
      %v1597 = vadd.f32 %v1536, 0.0
      %1598 = vst [vmem:[%s140] ss:$2 sm:$0xff] %v1597
      %v1599 = vadd.f32 %v1596, 0.0
      %s1600 = scalar_lea.vmem %s140, 1
      %1601 = vst [vmem:[%s1600] ss:$2 sm:$0xff] %v1599
      %p1602 = scmp.lt.s32.totalorder %s13, 1
      %s1603 = scalar_select %p1602, %s13, 1
      %s1604 = smul.addr %s1603, 8
      %s1605 = smul.addr %s1604, 2
      %s1606 = scalar_lea.vmem %s2, %s1605
      // Predicated region
      $region29: #{smoothness_loss.3} parent=27 // pred_check
        %p1607 = pneg %p78
      $region30: #{smoothness_loss.3} parent=27 // pred_check_branch
        %1609 = sbr.rel (%p1607) target = $region32
      $region31: #{smoothness_loss.3} parent=27 // pred_region
        _
      $region32: #{smoothness_loss.3} parent=27 // pred_fallthru
        _
    $region28: #{smoothness_loss.3} parent=5 // pred_fallthru
      _
    %p1610 = scmp.le.s32.totalorder 2, %s8
    // Predicated region
    $region33: #{smoothness_loss.3} parent=5 // pred_check
      %p1611 = pneg %p1610
    $region34: #{smoothness_loss.3} parent=5 // pred_check_branch
      %1613 = sbr.rel (%p1611) target = $region36
    $region35: #{smoothness_loss.3} parent=5 // pred_region
      %s1614 = ssub.s32 %s8, 2
      // Predicated region
      $region37: #{smoothness_loss.3} parent=35 // pred_check
        %p1615 = pneg %p84
      $region38: #{smoothness_loss.3} parent=35 // pred_check_branch
        %1617 = sbr.rel (%p1615) target = $region40
      $region39: #{smoothness_loss.3} parent=35 // pred_region
        %p1618 = scmp.lt.s32.totalorder %s14, 1
        %s1619 = scalar_select %p1618, %s14, 1
        %s1620 = smul.addr %s1619, 8
        %s1621 = smul.addr %s1620, 2
        %s1622 = scalar_lea.vmem %s2, %s1621
      $region40: #{smoothness_loss.3} parent=35 // pred_fallthru
        _
    $region36: #{smoothness_loss.3} parent=5 // pred_fallthru
      _
  $region6: #{smoothness_loss.3} parent=0 // loop_footer
    %s12 = sadd.s32 1, %s8
  $region7: #{smoothness_loss.3} parent=0 // loop_footer_branch
    %7 = sbr.rel target = $region3
  $region8: #{smoothness_loss.3} parent=0 // loop_exit
    _

// kernel: smoothness_loss.5
$region0: #{smoothness_loss.5}
  #allocation0 [shape = 'u32[]', space=smem, size = 0x4, offset = 0x4, fixed_abs, tag = 'smem constant byte address 0x4 - core index']
  #allocation1 [shape = 'u32[144,128]{1,0:T(1,128)}', space=vmem, size = 0x12000, scoped, tag = 'internal scratch']
  %s0 = inlined_call_operand.vmem [shape: f32[2,4,1,128], index: 0, kind: input, shape index: {}]
  %s1 = inlined_call_operand.vmem [shape: f32[2,128], index: 1, kind: input, shape index: {}]
  %s2 = inlined_call_operand.vmem [shape: f32[2,2,128], index: 2, kind: output, shape index: {}]
  %s3 = sld [smem:[#allocation0]]
  $region41: #{smoothness_loss.5} parent=0
    _
  %s5 = ssub.s32 1, %s3
  %s6 = scalar_select 0, %s5, %s3
  loop: start=0, step=1, limit=4
  $region2: #{smoothness_loss.5} parent=0 // loop_pre_header
    _
  $region3: #{smoothness_loss.5} parent=0 // loop_header
    %s8 = sphi 0, %s12
    %p9 = scmp.ge.s32.totalorder %s8, 4
    %s18 = sphi 0, %s20
    %s21 = sphi 0, %s18
    %s22 = sphi 0, %s21
    %s38 = sphi 0, %s22
    %s42 = sphi 0, %s42
    %s44 = sphi 0, %s42
    %s45 = sphi 0, %s44
    %s59 = sphi 0, %s45
    %s65 = sphi 0, %s67
    %s68 = sphi 0, %s65
    %s69 = sphi 0, %s68
    %s85 = sphi 0, %s69
  $region4: #{smoothness_loss.5} parent=0 // loop_header_branch
    %11 = sbr.rel (%p9) target = $region8
  $region5: #{smoothness_loss.5} parent=0 // loop_body
    %s13 = ssub.s32 %s8, 1
    %s14 = ssub.s32 %s8, 2
    %s15 = sadd.s32 %s8, 1
    %s16 = ssub.s32 %s8, %s15
    %p17 = scmp.eq.s32.totalorder %s16, 0
    %s19 = sadd.s32 %s18, 1
    %s20 = scalar_select %p17, %s18, %s19
    %p23 = pneg %p17
    %p24 = scmp.eq.s32.totalorder %s8, 1
    %p25 = por %p23, %p24
    %p26 = scmp.ne.s32.totalorder %s18, %s21
    %p27 = scmp.eq.s32.totalorder %s8, 0
    %p28 = por %p26, %p27
    %p29 = scmp.ne.s32.totalorder %s18, %s21
    %p30 = scmp.eq.s32.totalorder %s13, 1
    %p31 = por %p29, %p30
    %p32 = scmp.ne.s32.totalorder %s21, %s22
    %p33 = scmp.eq.s32.totalorder %s13, 0
    %p34 = por %p32, %p33
    %p35 = scmp.ne.s32.totalorder %s21, %s22
    %p36 = scmp.eq.s32.totalorder %s14, 1
    %p37 = por %p35, %p36
    %p39 = scmp.ne.s32.totalorder %s22, %s38
    %p40 = scmp.eq.s32.totalorder %s14, 0
    %p41 = por %p39, %p40
    %s43 = sadd.s32 %s42, 1
    %p46 = scmp.eq.s32.totalorder %s8, 1
    %p47 = scmp.ne.s32.totalorder %s42, %s44
    %p48 = scmp.eq.s32.totalorder %s8, 0
    %p49 = por %p47, %p48
    %p50 = scmp.ne.s32.totalorder %s42, %s44
    %p51 = scmp.eq.s32.totalorder %s13, 1
    %p52 = por %p50, %p51
    %p53 = scmp.ne.s32.totalorder %s44, %s45
    %p54 = scmp.eq.s32.totalorder %s13, 0
    %p55 = por %p53, %p54
    %p56 = scmp.ne.s32.totalorder %s44, %s45
    %p57 = scmp.eq.s32.totalorder %s14, 1
    %p58 = por %p56, %p57
    %p60 = scmp.ne.s32.totalorder %s45, %s59
    %p61 = scmp.eq.s32.totalorder %s14, 0
    %p62 = por %p60, %p61
    %s63 = ssub.s32 %s8, %s15
    %p64 = scmp.eq.s32.totalorder %s63, 0
    %s66 = sadd.s32 %s65, 1
    %s67 = scalar_select %p64, %s65, %s66
    %p70 = pneg %p64
    %p71 = scmp.eq.s32.totalorder %s8, 1
    %p72 = por %p70, %p71
    %p73 = scmp.ne.s32.totalorder %s65, %s68
    %p74 = scmp.eq.s32.totalorder %s8, 0
    %p75 = por %p73, %p74
    %p76 = scmp.ne.s32.totalorder %s65, %s68
    %p77 = scmp.eq.s32.totalorder %s13, 1
    %p78 = por %p76, %p77
    %p79 = scmp.ne.s32.totalorder %s68, %s69
    %p80 = scmp.eq.s32.totalorder %s13, 0
    %p81 = por %p79, %p80
    %p82 = scmp.ne.s32.totalorder %s68, %s69
    %p83 = scmp.eq.s32.totalorder %s14, 1
    %p84 = por %p82, %p83
    %p86 = scmp.ne.s32.totalorder %s69, %s85
    %p87 = scmp.eq.s32.totalorder %s14, 0
    %p88 = por %p86, %p87
    %p89 = scmp.le.s32.totalorder 1, %s8
    %p90 = scmp.lt.s32.totalorder %s8, 3
    %p91 = pnand %p89, %p90
    %p92 = pneg %p91
    // Predicated region
    $region9: #{smoothness_loss.5} parent=5 // pred_check
      _
    $region10: #{smoothness_loss.5} parent=5 // pred_check_branch
      %94 = sbr.rel (%p91) target = $region12
    $region11: #{smoothness_loss.5} parent=5 // pred_region
      %s95 = ssub.s32 %s8, 1
      // Predicated region
      $region13: #{smoothness_loss.5} parent=11 // pred_check
        %p96 = pneg %p55
      $region14: #{smoothness_loss.5} parent=11 // pred_check_branch
        %98 = sbr.rel (%p96) target = $region16
      $region15: #{smoothness_loss.5} parent=11 // pred_region
        _
      $region16: #{smoothness_loss.5} parent=11 // pred_fallthru
        _
    $region12: #{smoothness_loss.5} parent=5 // pred_fallthru
      _
    %p99 = scmp.lt.s32.totalorder %s8, 2
    // Predicated region
    $region17: #{smoothness_loss.5} parent=5 // pred_check
      %p100 = pneg %p99
    $region18: #{smoothness_loss.5} parent=5 // pred_check_branch
      %102 = sbr.rel (%p100) target = $region20
    $region19: #{smoothness_loss.5} parent=5 // pred_region
      // Predicated region
      $region21: #{smoothness_loss.5} parent=19 // pred_check
        %p103 = pneg %p28
      $region22: #{smoothness_loss.5} parent=19 // pred_check_branch
        %105 = sbr.rel (%p103) target = $region24
      $region23: #{smoothness_loss.5} parent=19 // pred_region
        %p106 = scmp.lt.s32.totalorder %s8, 1
        %s107 = scalar_select %p106, %s8, 1
        %s108 = smul.addr %s107, 4
        %s109 = scalar_lea.vmem %s0, %s108
      $region24: #{smoothness_loss.5} parent=19 // pred_fallthru
        _
    $region20: #{smoothness_loss.5} parent=5 // pred_fallthru
      _
    %p110 = scmp.le.s32.totalorder 1, %s8
    %p111 = scmp.lt.s32.totalorder %s8, 3
    %p112 = pnand %p110, %p111
    %p113 = pneg %p112
    // Predicated region
    $region25: #{smoothness_loss.5} parent=5 // pred_check
      _
    $region26: #{smoothness_loss.5} parent=5 // pred_check_branch
      %115 = sbr.rel (%p112) target = $region28
    $region27: #{smoothness_loss.5} parent=5 // pred_region
      %s116 = ssub.s32 %s8, 1
      %p117 = scmp.lt.s32.totalorder %s13, 1
      %s118 = scalar_select %p117, %s13, 1
      %s119 = smul.addr %s118, 4
      %s120 = scalar_lea.vmem %s0, %s119
      %p121 = pneg %p34
      %p122 = pneg %p31
      %p123 = pneg %p55
      %p124 = pneg %p52
      %p125 = pneg %p81
      %p126 = pneg %p78
      %p127 = scmp.lt.s32.totalorder %s13, 1
      %s128 = scalar_select %p127, %s13, 1
      %s129 = smul.addr %s128, 2
      %s130 = scalar_lea.vmem %s2, %s129
      %p131 = scmp.lt.s32.totalorder %s13, 1
      %s132 = scalar_select %p131, %s13, 1
      %s133 = smul.addr %s132, 4
      %s134 = scalar_lea.vmem %s0, %s133
      %p135 = scmp.lt.s32.totalorder %s13, 1
      %s136 = scalar_select %p135, %s13, 1
      %s137 = smul.addr %s136, 2
      %s138 = scalar_lea.vmem %s2, %s137
      %v139 = vld [vmem:[%s134] sm:$0x1]
      %v140 = vld [vmem:[%s134 + $0x1] sm:$0x1]
      %v141 = vld [vmem:[%s134 + $0x2] sm:$0x1]
      %v142 = vld [vmem:[%s134 + $0x3] sm:$0x1]
      %143 = vrot.lane.b32.xlu0 %v139, 112
      %v144 = vpop.permute.xlu0 %143
      %145 = vrot.lane.b32.xlu0 %v140, 112
      %v146 = vpop.permute.xlu0 %145
      %147 = vrot.lane.b32.xlu0 %v141, 112
      %v148 = vpop.permute.xlu0 %147
      %149 = vrot.lane.b32.xlu0 %v142, 112
      %v150 = vpop.permute.xlu0 %149
      %151 = vrot.lane.b32.xlu0 %v139, 127
      %v152 = vpop.permute.xlu0 %151
      %153 = vrot.lane.b32.xlu0 %v140, 127
      %v154 = vpop.permute.xlu0 %153
      %155 = vrot.lane.b32.xlu0 %v141, 127
      %v156 = vpop.permute.xlu0 %155
      %157 = vrot.lane.b32.xlu0 %v142, 127
      %v158 = vpop.permute.xlu0 %157
      %v159 = vsub.f32 %v139, %v144
      %v160 = vsub.f32 %v140, %v146
      %v161 = vsub.f32 %v141, %v148
      %v162 = vsub.f32 %v142, %v150
      %v163 = vand.u32 2147483647, %v159
      %v164 = vand.u32 2147483647, %v160
      %v165 = vand.u32 2147483647, %v161
      %v166 = vand.u32 2147483647, %v162
      %v167 = vsub.f32 %v139, %v152
      %v168 = vsub.f32 %v140, %v154
      %v169 = vsub.f32 %v141, %v156
      %v170 = vsub.f32 %v142, %v158
      %v171 = vand.u32 2147483647, %v167
      %v172 = vand.u32 2147483647, %v168
      %v173 = vand.u32 2147483647, %v169
      %v174 = vand.u32 2147483647, %v170
      %vm175 = vcmask 1040384
      %v176 = vsel %vm175, %v163, 0.0
      %v177 = vsel %vm175, %v164, 0.0
      %v178 = vadd.f32 %v176, %v177
      %v179 = vsel %vm175, %v165, 0.0
      %v180 = vadd.f32 %v178, %v179
      %v181 = vsub.f32 0.0, %v180
      %v182 = vmul.f32 %v181, 0.33333334
      %v183 = vmul.f32 %v182, 1.442695
      %v184 = vpow.pop %v183
      %v185 = vsel %vm175, %v171, 0.0
      %v186 = vsel %vm175, %v172, 0.0
      %v187 = vadd.f32 %v185, %v186
      %v188 = vsel %vm175, %v173, 0.0
      %v189 = vadd.f32 %v187, %v188
      %v190 = vsub.f32 0.0, %v189
      %v191 = vmul.f32 %v190, 0.33333334
      %v192 = vmul.f32 %v191, 1.442695
      %v193 = vpow.pop %v192
      %v194 = vld [vmem:[%s1] sm:$0x1]
      %v195 = vmul.f32 %v184, %v194
      %v196 = vld [vmem:[%s1 + $0x1] sm:$0x1]
      %v197 = vmul.f32 %v193, %v196
      %v198 = vadd.f32 %v166, 0.0
      %v199 = vmul.f32 %v198, %v195
      %v200 = vadd.f32 %v174, 0.0
      %v201 = vmul.f32 %v200, %v197
      %v202 = vadd.f32 %v199, 0.0
      %203 = vst [vmem:[%s138] sm:$0x1] %v202
      %v204 = vadd.f32 %v201, 0.0
      %205 = vst [vmem:[%s138 + $0x1] sm:$0x1] %v204
      %p206 = scmp.lt.s32.totalorder %s13, 1
      %s207 = scalar_select %p206, %s13, 1
      %s208 = smul.addr %s207, 2
      %s209 = scalar_lea.vmem %s2, %s208
      // Predicated region
      $region29: #{smoothness_loss.5} parent=27 // pred_check
        %p210 = pneg %p78
      $region30: #{smoothness_loss.5} parent=27 // pred_check_branch
        %212 = sbr.rel (%p210) target = $region32
      $region31: #{smoothness_loss.5} parent=27 // pred_region
        _
      $region32: #{smoothness_loss.5} parent=27 // pred_fallthru
        _
    $region28: #{smoothness_loss.5} parent=5 // pred_fallthru
      _
    %p213 = scmp.le.s32.totalorder 2, %s8
    // Predicated region
    $region33: #{smoothness_loss.5} parent=5 // pred_check
      %p214 = pneg %p213
    $region34: #{smoothness_loss.5} parent=5 // pred_check_branch
      %216 = sbr.rel (%p214) target = $region36
    $region35: #{smoothness_loss.5} parent=5 // pred_region
      %s217 = ssub.s32 %s8, 2
      // Predicated region
      $region37: #{smoothness_loss.5} parent=35 // pred_check
        %p218 = pneg %p84
      $region38: #{smoothness_loss.5} parent=35 // pred_check_branch
        %220 = sbr.rel (%p218) target = $region40
      $region39: #{smoothness_loss.5} parent=35 // pred_region
        %p221 = scmp.lt.s32.totalorder %s14, 1
        %s222 = scalar_select %p221, %s14, 1
        %s223 = smul.addr %s222, 2
        %s224 = scalar_lea.vmem %s2, %s223
      $region40: #{smoothness_loss.5} parent=35 // pred_fallthru
        _
    $region36: #{smoothness_loss.5} parent=5 // pred_fallthru
      _
  $region6: #{smoothness_loss.5} parent=0 // loop_footer
    %s12 = sadd.s32 1, %s8
  $region7: #{smoothness_loss.5} parent=0 // loop_footer_branch
    %7 = sbr.rel target = $region3
  $region8: #{smoothness_loss.5} parent=0 // loop_exit
    _

</llo_original>
